<compile_context>
chip_gen: v5e
topology: v5e:2x2
jax: 0.10.0
libtpu: 0.0.40
codegen_flags: <defaults>
</compile_context>

<pallas_src>
import jax
import jax.numpy as jnp
from jax.experimental import pallas as pl
from jax.experimental.pallas import tpu as pltpu

HIDDEN = 64
VOCAB = 128          # output_size
MAX_LENGTH = 100
T_STEPS = 8          # decode steps fused into one kernel call


def attn_decoder_kernel(
    # scalar prefetch
    ids_ref,                                   # SMEM (T,) int32 token ids (one per step)
    # VMEM-resident inputs (constant index_map -> DMA'd once)
    emb_ref,                                   # (V, H)  f32   embedding table
    h0_ref,                                    # (1, H)  f32   initial hidden
    enc_ref,                                   # (Lp, H) f32   encoder outputs (rows >= L zero)
    wa_e_ref, wa_h_ref, ba_ref,                # (H, Lp) bf16, (H, Lp) bf16, (1, Lp) f32
    wc_e_ref, wc_h_ref, bc_ref,                # (H, H) bf16, (H, H) bf16, (1, H) f32
    w_ir_ref, w_iz_ref, w_in_ref,              # (H, H) bf16  gru.weight_ih_l0.T per gate
    w_hr_ref, w_hz_ref, w_hn_ref,              # (H, H) bf16  gru.weight_hh_l0.T per gate
    b_r_ref, b_z_ref, b_in_ref, b_hn_ref,      # (1, H) f32
    w_out_ref, b_out_ref,                      # (H, V) bf16, (1, V) f32
    # VMEM-resident outputs (one writeback at end of grid)
    logp_ref,                                  # (T, V)  f32
    hid_ref,                                   # (T, H)  f32
    attnw_ref,                                 # (T, Lp) f32
    # scratch
    h_carry,                                   # (1, H)  f32
):
    f32 = jnp.float32
    t = pl.program_id(0)

    @pl.when(t == 0)
    def _():
        h_carry[...] = h0_ref[...]

    # ---- embedding lookup: dynamic row gather from the resident table ----
    idx = ids_ref[t]
    embedded = emb_ref[pl.ds(idx, 1), :]                      # (1, H)
    # TODO(synk): dropout_p=0.1 is a no-op in eval mode; training-mode dropout not implemented.

    h = h_carry[...]                                          # (1, H)

    def mm(a, w_ref):  # bf16 weights -> f32 MXU matmul with f32 accumulation
        return jnp.dot(a, w_ref[...].astype(f32), preferred_element_type=f32)

    # ---- attention weights: softmax(attn(cat(embedded, hidden))) via split matmuls ----
    attn_logits = mm(embedded, wa_e_ref) + mm(h, wa_h_ref) + ba_ref[...]   # (1, Lp)
    m = jnp.max(attn_logits, axis=1, keepdims=True)
    e = jnp.exp(attn_logits - m)
    attn_w = e * pl.reciprocal(jnp.sum(e, axis=1, keepdims=True), approx=True)
    attnw_ref[pl.ds(t, 1), :] = attn_w

    # ---- attn_applied = attn_w @ encoder_outputs (the bmm, batch 1) ----
    attn_applied = jnp.dot(attn_w, enc_ref[...], preferred_element_type=f32)  # (1, H)

    # ---- attn_combine + relu (split matmuls, no concat) ----
    x = mm(embedded, wc_e_ref) + mm(attn_applied, wc_h_ref) + bc_ref[...]
    x = jnp.maximum(x, 0.0)                                   # (1, H)

    # ---- GRU cell (PyTorch gate order r, z, n; per-gate weights -> lane-aligned) ----
    r = jax.nn.sigmoid(mm(x, w_ir_ref) + mm(h, w_hr_ref) + b_r_ref[...])
    z = jax.nn.sigmoid(mm(x, w_iz_ref) + mm(h, w_hz_ref) + b_z_ref[...])
    n = jnp.tanh(mm(x, w_in_ref) + b_in_ref[...] + r * (mm(h, w_hn_ref) + b_hn_ref[...]))
    h_new = (1.0 - z) * n + z * h                             # (1, H)

    h_carry[...] = h_new
    hid_ref[pl.ds(t, 1), :] = h_new

    # ---- output projection + log_softmax ----
    logits = mm(h_new, w_out_ref) + b_out_ref[...]            # (1, V)
    lm = jnp.max(logits, axis=1, keepdims=True)
    shifted = logits - lm
    lse = jnp.log(jnp.sum(jnp.exp(shifted), axis=1, keepdims=True))
    logp_ref[pl.ds(t, 1), :] = shifted - lse


def attn_decoder_decode(params, tokens, hidden, encoder_outputs):
    """Run T teacher-forced decode steps (each step == AttnDecoderRNN.forward) in one call.

    tokens: (T,) int32 ; hidden: (1,1,H) ; encoder_outputs: (L,H)
    Returns: logp (T,V), hidden_seq (T,H), attn_weights (T,L).
    """
    f32, bf16 = jnp.float32, jnp.bfloat16
    H = hidden.shape[-1]
    L = encoder_outputs.shape[0]
    V = params["emb"].shape[0]
    T = tokens.shape[0]
    Lp = ((L + 127) // 128) * 128
    NEG = jnp.float32(-1e30)

    # Clamp token ids (VMEM reads have no bounds check).
    tokens = jnp.clip(tokens.astype(jnp.int32), 0, V - 1)
    h0 = hidden.reshape(1, H).astype(f32)

    # Pad encoder outputs / attention weights to a lane-dense 128 length.
    enc_p = jnp.zeros((Lp, H), f32).at[:L, :].set(encoder_outputs.astype(f32))
    w_attn_p = jnp.zeros((2 * H, Lp), f32).at[:, :L].set(params["w_attn"])
    wa_e = w_attn_p[:H].astype(bf16)
    wa_h = w_attn_p[H:].astype(bf16)
    ba = jnp.full((1, Lp), NEG, f32).at[:, :L].set(params["b_attn"])

    # attn_combine split into the embedded / attn_applied halves.
    wc_e = params["w_comb"][:H].astype(bf16)
    wc_h = params["w_comb"][H:].astype(bf16)
    bc = params["b_comb"].astype(f32)

    # GRU weights split per gate (r, z, n); r/z biases pre-combined.
    w_ih, w_hh, b_ih, b_hh = params["w_ih"], params["w_hh"], params["b_ih"], params["b_hh"]
    w_ir, w_iz, w_in = (w_ih[:, :H].astype(bf16), w_ih[:, H:2 * H].astype(bf16),
                        w_ih[:, 2 * H:].astype(bf16))
    w_hr, w_hz, w_hn = (w_hh[:, :H].astype(bf16), w_hh[:, H:2 * H].astype(bf16),
                        w_hh[:, 2 * H:].astype(bf16))
    b_r = (b_ih[:, :H] + b_hh[:, :H]).astype(f32)
    b_z = (b_ih[:, H:2 * H] + b_hh[:, H:2 * H]).astype(f32)
    b_in = b_ih[:, 2 * H:].astype(f32)
    b_hn = b_hh[:, 2 * H:].astype(f32)

    # Embedding table kept f32 (tiny at this vocab; dynamic row gather stays 32-bit).
    # TODO(synk): at realistic vocab sizes, switch to a scalar-prefetched per-row gather BlockSpec.
    emb = params["emb"].astype(f32)
    w_out = params["w_out"].astype(bf16)
    b_out = params["b_out"].astype(f32)

    const = lambda t, ids: (0, 0)          # resident block (loaded / written back once)
    vspec = lambda shape: pl.BlockSpec(shape, const)

    grid_spec = pltpu.PrefetchScalarGridSpec(
        num_scalar_prefetch=1,
        grid=(T,),
        in_specs=[
            vspec((V, H)),                                   # emb
            vspec((1, H)),                                   # h0
            vspec((Lp, H)),                                  # encoder outputs (padded)
            vspec((H, Lp)), vspec((H, Lp)), vspec((1, Lp)),  # attn
            vspec((H, H)), vspec((H, H)), vspec((1, H)),     # attn_combine
            vspec((H, H)), vspec((H, H)), vspec((H, H)),     # w_ir, w_iz, w_in
            vspec((H, H)), vspec((H, H)), vspec((H, H)),     # w_hr, w_hz, w_hn
            vspec((1, H)), vspec((1, H)), vspec((1, H)), vspec((1, H)),  # gru biases
            vspec((H, V)), vspec((1, V)),                    # out projection
        ],
        out_specs=(
            pl.BlockSpec((T, V), const),
            pl.BlockSpec((T, H), const),
            pl.BlockSpec((T, Lp), const),
        ),
        scratch_shapes=[pltpu.VMEM((1, H), f32)],
    )

    logp, h_seq, attn_w = pl.pallas_call(
        attn_decoder_kernel,
        grid_spec=grid_spec,
        out_shape=(
            jax.ShapeDtypeStruct((T, V), f32),
            jax.ShapeDtypeStruct((T, H), f32),
            jax.ShapeDtypeStruct((T, Lp), f32),
        ),
        compiler_params=pltpu.CompilerParams(dimension_semantics=("arbitrary",)),
    )(tokens, emb, h0, enc_p,
      wa_e, wa_h, ba,
      wc_e, wc_h, bc,
      w_ir, w_iz, w_in, w_hr, w_hz, w_hn,
      b_r, b_z, b_in, b_hn,
      w_out, b_out)

    return logp, h_seq, attn_w[:, :L]


def reference_forward(params, token_idx, hidden, encoder_outputs):
    """Pure-JAX single-step reference mirroring the PyTorch forward (eval mode)."""
    H = hidden.shape[-1]
    dot = lambda a, b: jnp.dot(a, b, precision=jax.lax.Precision.HIGHEST)
    embedded = params["emb"][token_idx][None, :]                 # (1, H)
    h = hidden.reshape(1, H)
    attn_logits = dot(jnp.concatenate([embedded, h], 1), params["w_attn"]) + params["b_attn"]
    attn_w = jax.nn.softmax(attn_logits, axis=1)
    attn_applied = dot(attn_w, encoder_outputs)
    x = dot(jnp.concatenate([embedded, attn_applied], 1), params["w_comb"]) + params["b_comb"]
    x = jnp.maximum(x, 0.0)
    gi = dot(x, params["w_ih"]) + params["b_ih"]
    gh = dot(h, params["w_hh"]) + params["b_hh"]
    i_r, i_z, i_n = gi[:, :H], gi[:, H:2 * H], gi[:, 2 * H:]
    h_r, h_z, h_n = gh[:, :H], gh[:, H:2 * H], gh[:, 2 * H:]
    r = jax.nn.sigmoid(i_r + h_r)
    z = jax.nn.sigmoid(i_z + h_z)
    n = jnp.tanh(i_n + r * h_n)
    h_new = (1.0 - z) * n + z * h
    logits = dot(h_new, params["w_out"]) + params["b_out"]
    return jax.nn.log_softmax(logits, axis=1), h_new.reshape(1, 1, H), attn_w


def init_params(key, hidden_size, output_size, max_length):
    ks = jax.random.split(key, 12)
    f = lambda k, shape: (jax.random.normal(k, shape, jnp.float32) * 0.1)
    return {
        "emb":    f(ks[0], (output_size, hidden_size)),
        "w_attn": f(ks[1], (2 * hidden_size, max_length)),   # attn.weight.T
        "b_attn": f(ks[2], (1, max_length)),
        "w_comb": f(ks[3], (2 * hidden_size, hidden_size)),  # attn_combine.weight.T
        "b_comb": f(ks[4], (1, hidden_size)),
        "w_ih":   f(ks[5], (hidden_size, 3 * hidden_size)),  # gru.weight_ih_l0.T  [r|z|n]
        "b_ih":   f(ks[6], (1, 3 * hidden_size)),
        "w_hh":   f(ks[7], (hidden_size, 3 * hidden_size)),  # gru.weight_hh_l0.T  [r|z|n]
        "b_hh":   f(ks[8], (1, 3 * hidden_size)),
        "w_out":  f(ks[9], (hidden_size, output_size)),      # out.weight.T
        "b_out":  f(ks[10], (1, output_size)),
    }


def bf16_round_matmul_weights(params):
    """Round matmul weights through bf16 so the f32 reference uses the exact values the
    kernel holds in bf16 (biases / embedding stay f32 on both sides)."""
    rd = lambda x: x.astype(jnp.bfloat16).astype(jnp.float32)
    rounded = dict(params)
    for k in ("w_attn", "w_comb", "w_ih", "w_hh", "w_out"):
        rounded[k] = rd(params[k])
    return rounded


if __name__ == "__main__":
    key = jax.random.PRNGKey(0)
    k_par, k_hid, k_enc, k_tok = jax.random.split(key, 4)

    params = bf16_round_matmul_weights(init_params(k_par, HIDDEN, VOCAB, MAX_LENGTH))

    tokens = jax.random.randint(k_tok, (T_STEPS,), 0, VOCAB, dtype=jnp.int32)
    hidden0 = jax.random.normal(k_hid, (1, 1, HIDDEN), jnp.float32) * 0.1
    encoder_outputs = jax.random.normal(k_enc, (MAX_LENGTH, HIDDEN), jnp.float32) * 0.1

    logp_seq, h_seq, attn_seq = jax.block_until_ready(
        attn_decoder_decode(params, tokens, hidden0, encoder_outputs)
    )

    # correctness: step the pure-JAX reference of the PyTorch forward T times
    h = hidden0
    ref_logps, ref_hs, ref_attns = [], [], []
    for t in range(T_STEPS):
        lp, h, aw = reference_forward(params, tokens[t], h, encoder_outputs)
        ref_logps.append(lp)
        ref_hs.append(h.reshape(1, HIDDEN))
        ref_attns.append(aw)
    ref_logp = jnp.concatenate(ref_logps, axis=0)
    ref_h = jnp.concatenate(ref_hs, axis=0)
    ref_attn = jnp.concatenate(ref_attns, axis=0)

    assert logp_seq.shape == (T_STEPS, VOCAB)
    assert h_seq.shape == (T_STEPS, HIDDEN)
    assert attn_seq.shape == (T_STEPS, MAX_LENGTH)
    assert jnp.allclose(logp_seq, ref_logp, atol=1e-3, rtol=1e-3), "log_softmax output mismatch"
    assert jnp.allclose(h_seq, ref_h, atol=1e-3, rtol=1e-3), "hidden mismatch"
    assert jnp.allclose(attn_seq, ref_attn, atol=1e-3, rtol=1e-3), "attention weights mismatch"

    print("KERNEL_OK")
</pallas_src>

<mosaic_0001>
module attributes {stable_mosaic.version = 11 : i64} {
  func.func @attn_decoder_kernel(%arg0: i32, %arg1: memref<8xi32, #tpu.memory_space<smem>>, %arg2: memref<128x64xf32, #tpu.memory_space<vmem>>, %arg3: memref<1x64xf32, #tpu.memory_space<vmem>>, %arg4: memref<128x64xf32, #tpu.memory_space<vmem>>, %arg5: memref<64x128xbf16, #tpu.memory_space<vmem>>, %arg6: memref<64x128xbf16, #tpu.memory_space<vmem>>, %arg7: memref<1x128xf32, #tpu.memory_space<vmem>>, %arg8: memref<64x64xbf16, #tpu.memory_space<vmem>>, %arg9: memref<64x64xbf16, #tpu.memory_space<vmem>>, %arg10: memref<1x64xf32, #tpu.memory_space<vmem>>, %arg11: memref<64x64xbf16, #tpu.memory_space<vmem>>, %arg12: memref<64x64xbf16, #tpu.memory_space<vmem>>, %arg13: memref<64x64xbf16, #tpu.memory_space<vmem>>, %arg14: memref<64x64xbf16, #tpu.memory_space<vmem>>, %arg15: memref<64x64xbf16, #tpu.memory_space<vmem>>, %arg16: memref<64x64xbf16, #tpu.memory_space<vmem>>, %arg17: memref<1x64xf32, #tpu.memory_space<vmem>>, %arg18: memref<1x64xf32, #tpu.memory_space<vmem>>, %arg19: memref<1x64xf32, #tpu.memory_space<vmem>>, %arg20: memref<1x64xf32, #tpu.memory_space<vmem>>, %arg21: memref<64x128xbf16, #tpu.memory_space<vmem>>, %arg22: memref<1x128xf32, #tpu.memory_space<vmem>>, %arg23: memref<8x128xf32, #tpu.memory_space<vmem>>, %arg24: memref<8x64xf32, #tpu.memory_space<vmem>>, %arg25: memref<8x128xf32, #tpu.memory_space<vmem>>, %arg26: memref<1x64xf32, #tpu.memory_space<vmem>>) attributes {dimension_semantics = [#tpu.dimension_semantics<arbitrary>], iteration_bounds = array<i64: 8>, scalar_prefetch = 1 : i64, scratch_operands = 1 : i64, tpu.core_type = #tpu.core_type<tc>, window_params = [{pipeline_mode = #tpu.pipeline_mode<synchronous>, transform_indices = @transform_0, window_bounds = array<i64: 128, 64>}, {pipeline_mode = #tpu.pipeline_mode<synchronous>, transform_indices = @transform_1, window_bounds = array<i64: 1, 64>}, {pipeline_mode = #tpu.pipeline_mode<synchronous>, transform_indices = @transform_2, window_bounds = array<i64: 128, 64>}, {pipeline_mode = #tpu.pipeline_mode<synchronous>, transform_indices = @transform_3, window_bounds = array<i64: 64, 128>}, {pipeline_mode = #tpu.pipeline_mode<synchronous>, transform_indices = @transform_4, window_bounds = array<i64: 64, 128>}, {pipeline_mode = #tpu.pipeline_mode<synchronous>, transform_indices = @transform_5, window_bounds = array<i64: 1, 128>}, {pipeline_mode = #tpu.pipeline_mode<synchronous>, transform_indices = @transform_6, window_bounds = array<i64: 64, 64>}, {pipeline_mode = #tpu.pipeline_mode<synchronous>, transform_indices = @transform_7, window_bounds = array<i64: 64, 64>}, {pipeline_mode = #tpu.pipeline_mode<synchronous>, transform_indices = @transform_8, window_bounds = array<i64: 1, 64>}, {pipeline_mode = #tpu.pipeline_mode<synchronous>, transform_indices = @transform_9, window_bounds = array<i64: 64, 64>}, {pipeline_mode = #tpu.pipeline_mode<synchronous>, transform_indices = @transform_10, window_bounds = array<i64: 64, 64>}, {pipeline_mode = #tpu.pipeline_mode<synchronous>, transform_indices = @transform_11, window_bounds = array<i64: 64, 64>}, {pipeline_mode = #tpu.pipeline_mode<synchronous>, transform_indices = @transform_12, window_bounds = array<i64: 64, 64>}, {pipeline_mode = #tpu.pipeline_mode<synchronous>, transform_indices = @transform_13, window_bounds = array<i64: 64, 64>}, {pipeline_mode = #tpu.pipeline_mode<synchronous>, transform_indices = @transform_14, window_bounds = array<i64: 64, 64>}, {pipeline_mode = #tpu.pipeline_mode<synchronous>, transform_indices = @transform_15, window_bounds = array<i64: 1, 64>}, {pipeline_mode = #tpu.pipeline_mode<synchronous>, transform_indices = @transform_16, window_bounds = array<i64: 1, 64>}, {pipeline_mode = #tpu.pipeline_mode<synchronous>, transform_indices = @transform_17, window_bounds = array<i64: 1, 64>}, {pipeline_mode = #tpu.pipeline_mode<synchronous>, transform_indices = @transform_18, window_bounds = array<i64: 1, 64>}, {pipeline_mode = #tpu.pipeline_mode<synchronous>, transform_indices = @transform_19, window_bounds = array<i64: 64, 128>}, {pipeline_mode = #tpu.pipeline_mode<synchronous>, transform_indices = @transform_20, window_bounds = array<i64: 1, 128>}, {pipeline_mode = #tpu.pipeline_mode<synchronous>, transform_indices = @transform_21, window_bounds = array<i64: 8, 128>}, {pipeline_mode = #tpu.pipeline_mode<synchronous>, transform_indices = @transform_22, window_bounds = array<i64: 8, 64>}, {pipeline_mode = #tpu.pipeline_mode<synchronous>, transform_indices = @transform_23, window_bounds = array<i64: 8, 128>}]} {
    %c0_i32 = arith.constant 0 : i32
    %0 = arith.cmpi eq, %arg0, %c0_i32 : i32
    %1 = arith.extui %0 : i1 to i32
    %c0_i32_0 = arith.constant 0 : i32
    %2 = arith.cmpi ne, %1, %c0_i32_0 : i32
    scf.if %2 {
      %c0_65 = arith.constant 0 : index
      %c0_66 = arith.constant 0 : index
      %108 = vector.load %arg3[%c0_65, %c0_66] : memref<1x64xf32, #tpu.memory_space<vmem>>, vector<1x64xf32>
      %c0_67 = arith.constant 0 : index
      %c0_68 = arith.constant 0 : index
      %109 = vector.load %arg26[%c0_67, %c0_68] : memref<1x64xf32, #tpu.memory_space<vmem>>, vector<1x64xf32>
      tpu.vector_store %arg26[%c0_67, %c0_68], %108 {strides = array<i32>} : memref<1x64xf32, #tpu.memory_space<vmem>>, vector<1x64xf32>,
    } else {
    }
    %3 = arith.index_cast %arg0 : i32 to index
    %4 = memref.load %arg1[%3] : memref<8xi32, #tpu.memory_space<smem>>
    %5 = arith.index_cast %4 : i32 to index
    %c0 = arith.constant 0 : index
    %6 = vector.load %arg2[%5, %c0] : memref<128x64xf32, #tpu.memory_space<vmem>>, vector<1x64xf32>
    %c0_1 = arith.constant 0 : index
    %c0_2 = arith.constant 0 : index
    %7 = vector.load %arg26[%c0_1, %c0_2] : memref<1x64xf32, #tpu.memory_space<vmem>>, vector<1x64xf32>
    %c0_3 = arith.constant 0 : index
    %c0_4 = arith.constant 0 : index
    %8 = vector.load %arg5[%c0_3, %c0_4] : memref<64x128xbf16, #tpu.memory_space<vmem>>, vector<64x128xbf16>
    %9 = arith.extf %8 : vector<64x128xbf16> to vector<64x128xf32>
    %cst = arith.constant dense<0.000000e+00> : vector<1x128xf32>
    %10 = tpu.matmul %6, %9, %cst {dimension_numbers = #tpu.dot_dimension_numbers<[1], [0], [0], [1], [0, 0, 1, 1], [], []>} : vector<1x64xf32>, vector<64x128xf32>, vector<1x128xf32> -> vector<1x128xf32>
    %c0_5 = arith.constant 0 : index
    %c0_6 = arith.constant 0 : index
    %11 = vector.load %arg6[%c0_5, %c0_6] : memref<64x128xbf16, #tpu.memory_space<vmem>>, vector<64x128xbf16>
    %12 = arith.extf %11 : vector<64x128xbf16> to vector<64x128xf32>
    %cst_7 = arith.constant dense<0.000000e+00> : vector<1x128xf32>
    %13 = tpu.matmul %7, %12, %cst_7 {dimension_numbers = #tpu.dot_dimension_numbers<[1], [0], [0], [1], [0, 0, 1, 1], [], []>} : vector<1x64xf32>, vector<64x128xf32>, vector<1x128xf32> -> vector<1x128xf32>
    %14 = arith.addf %10, %13 : vector<1x128xf32>
    %c0_8 = arith.constant 0 : index
    %c0_9 = arith.constant 0 : index
    %15 = vector.load %arg7[%c0_8, %c0_9] : memref<1x128xf32, #tpu.memory_space<vmem>>, vector<1x128xf32>
    %16 = arith.addf %14, %15 : vector<1x128xf32>
    %cst_10 = arith.constant dense<0xFF800000> : vector<1xf32>
    %17 = vector.multi_reduction <maximumf>, %16, %cst_10 [1] : vector<1x128xf32> to vector<1xf32>
    %18 = vector.shape_cast %17 : vector<1xf32> to vector<1x1xf32>
    %19 = vector.broadcast %18 : vector<1x1xf32> to vector<1x128xf32>
    %20 = arith.subf %16, %19 : vector<1x128xf32>
    %21 = math.exp %20 : vector<1x128xf32>
    %cst_11 = arith.constant dense<0.000000e+00> : vector<1xf32>
    %22 = vector.multi_reduction <add>, %21, %cst_11 [1] : vector<1x128xf32> to vector<1xf32>
    %23 = vector.shape_cast %22 : vector<1xf32> to vector<1x1xf32>
    %24 = tpu.reciprocal %23 {approx = true} : vector<1x1xf32> -> vector<1x1xf32>
    %25 = vector.broadcast %24 : vector<1x1xf32> to vector<1x128xf32>
    %26 = arith.mulf %21, %25 : vector<1x128xf32>
    %27 = arith.index_cast %arg0 : i32 to index
    %c0_12 = arith.constant 0 : index
    %28 = vector.load %arg25[%27, %c0_12] : memref<8x128xf32, #tpu.memory_space<vmem>>, vector<1x128xf32>
    tpu.vector_store %arg25[%27, %c0_12], %26 {strides = array<i32>} : memref<8x128xf32, #tpu.memory_space<vmem>>, vector<1x128xf32>,
    %c0_13 = arith.constant 0 : index
    %c0_14 = arith.constant 0 : index
    %29 = vector.load %arg4[%c0_13, %c0_14] : memref<128x64xf32, #tpu.memory_space<vmem>>, vector<128x64xf32>
    %cst_15 = arith.constant dense<0.000000e+00> : vector<1x64xf32>
    %30 = tpu.matmul %26, %29, %cst_15 {dimension_numbers = #tpu.dot_dimension_numbers<[1], [0], [0], [1], [0, 0, 1, 1], [], []>} : vector<1x128xf32>, vector<128x64xf32>, vector<1x64xf32> -> vector<1x64xf32>
    %c0_16 = arith.constant 0 : index
    %c0_17 = arith.constant 0 : index
    %31 = vector.load %arg8[%c0_16, %c0_17] : memref<64x64xbf16, #tpu.memory_space<vmem>>, vector<64x64xbf16>
    %32 = arith.extf %31 : vector<64x64xbf16> to vector<64x64xf32>
    %cst_18 = arith.constant dense<0.000000e+00> : vector<1x64xf32>
    %33 = tpu.matmul %6, %32, %cst_18 {dimension_numbers = #tpu.dot_dimension_numbers<[1], [0], [0], [1], [0, 0, 1, 1], [], []>} : vector<1x64xf32>, vector<64x64xf32>, vector<1x64xf32> -> vector<1x64xf32>
    %c0_19 = arith.constant 0 : index
    %c0_20 = arith.constant 0 : index
    %34 = vector.load %arg9[%c0_19, %c0_20] : memref<64x64xbf16, #tpu.memory_space<vmem>>, vector<64x64xbf16>
    %35 = arith.extf %34 : vector<64x64xbf16> to vector<64x64xf32>
    %cst_21 = arith.constant dense<0.000000e+00> : vector<1x64xf32>
    %36 = tpu.matmul %30, %35, %cst_21 {dimension_numbers = #tpu.dot_dimension_numbers<[1], [0], [0], [1], [0, 0, 1, 1], [], []>} : vector<1x64xf32>, vector<64x64xf32>, vector<1x64xf32> -> vector<1x64xf32>
    %37 = arith.addf %33, %36 : vector<1x64xf32>
    %c0_22 = arith.constant 0 : index
    %c0_23 = arith.constant 0 : index
    %38 = vector.load %arg10[%c0_22, %c0_23] : memref<1x64xf32, #tpu.memory_space<vmem>>, vector<1x64xf32>
    %39 = arith.addf %37, %38 : vector<1x64xf32>
    %cst_24 = arith.constant 0.000000e+00 : f32
    %40 = vector.broadcast %cst_24 : f32 to vector<1x64xf32>
    %41 = arith.maximumf %39, %40 : vector<1x64xf32>
    %c0_25 = arith.constant 0 : index
    %c0_26 = arith.constant 0 : index
    %42 = vector.load %arg11[%c0_25, %c0_26] : memref<64x64xbf16, #tpu.memory_space<vmem>>, vector<64x64xbf16>
    %43 = arith.extf %42 : vector<64x64xbf16> to vector<64x64xf32>
    %cst_27 = arith.constant dense<0.000000e+00> : vector<1x64xf32>
    %44 = tpu.matmul %41, %43, %cst_27 {dimension_numbers = #tpu.dot_dimension_numbers<[1], [0], [0], [1], [0, 0, 1, 1], [], []>} : vector<1x64xf32>, vector<64x64xf32>, vector<1x64xf32> -> vector<1x64xf32>
    %c0_28 = arith.constant 0 : index
    %c0_29 = arith.constant 0 : index
    %45 = vector.load %arg14[%c0_28, %c0_29] : memref<64x64xbf16, #tpu.memory_space<vmem>>, vector<64x64xbf16>
    %46 = arith.extf %45 : vector<64x64xbf16> to vector<64x64xf32>
    %cst_30 = arith.constant dense<0.000000e+00> : vector<1x64xf32>
    %47 = tpu.matmul %7, %46, %cst_30 {dimension_numbers = #tpu.dot_dimension_numbers<[1], [0], [0], [1], [0, 0, 1, 1], [], []>} : vector<1x64xf32>, vector<64x64xf32>, vector<1x64xf32> -> vector<1x64xf32>
    %48 = arith.addf %44, %47 : vector<1x64xf32>
    %c0_31 = arith.constant 0 : index
    %c0_32 = arith.constant 0 : index
    %49 = vector.load %arg17[%c0_31, %c0_32] : memref<1x64xf32, #tpu.memory_space<vmem>>, vector<1x64xf32>
    %50 = arith.addf %48, %49 : vector<1x64xf32>
    %51 = arith.negf %50 : vector<1x64xf32>
    %52 = math.exp %51 : vector<1x64xf32>
    %cst_33 = arith.constant 1.000000e+00 : f32
    %53 = vector.broadcast %cst_33 : f32 to vector<1x64xf32>
    %54 = arith.addf %53, %52 : vector<1x64xf32>
    %55 = arith.divf %53, %54 : vector<1x64xf32>
    %c0_34 = arith.constant 0 : index
    %c0_35 = arith.constant 0 : index
    %56 = vector.load %arg12[%c0_34, %c0_35] : memref<64x64xbf16, #tpu.memory_space<vmem>>, vector<64x64xbf16>
    %57 = arith.extf %56 : vector<64x64xbf16> to vector<64x64xf32>
    %cst_36 = arith.constant dense<0.000000e+00> : vector<1x64xf32>
    %58 = tpu.matmul %41, %57, %cst_36 {dimension_numbers = #tpu.dot_dimension_numbers<[1], [0], [0], [1], [0, 0, 1, 1], [], []>} : vector<1x64xf32>, vector<64x64xf32>, vector<1x64xf32> -> vector<1x64xf32>
    %c0_37 = arith.constant 0 : index
    %c0_38 = arith.constant 0 : index
    %59 = vector.load %arg15[%c0_37, %c0_38] : memref<64x64xbf16, #tpu.memory_space<vmem>>, vector<64x64xbf16>
    %60 = arith.extf %59 : vector<64x64xbf16> to vector<64x64xf32>
    %cst_39 = arith.constant dense<0.000000e+00> : vector<1x64xf32>
    %61 = tpu.matmul %7, %60, %cst_39 {dimension_numbers = #tpu.dot_dimension_numbers<[1], [0], [0], [1], [0, 0, 1, 1], [], []>} : vector<1x64xf32>, vector<64x64xf32>, vector<1x64xf32> -> vector<1x64xf32>
    %62 = arith.addf %58, %61 : vector<1x64xf32>
    %c0_40 = arith.constant 0 : index
    %c0_41 = arith.constant 0 : index
    %63 = vector.load %arg18[%c0_40, %c0_41] : memref<1x64xf32, #tpu.memory_space<vmem>>, vector<1x64xf32>
    %64 = arith.addf %62, %63 : vector<1x64xf32>
    %65 = arith.negf %64 : vector<1x64xf32>
    %66 = math.exp %65 : vector<1x64xf32>
    %cst_42 = arith.constant 1.000000e+00 : f32
    %67 = vector.broadcast %cst_42 : f32 to vector<1x64xf32>
    %68 = arith.addf %67, %66 : vector<1x64xf32>
    %69 = arith.divf %67, %68 : vector<1x64xf32>
    %c0_43 = arith.constant 0 : index
    %c0_44 = arith.constant 0 : index
    %70 = vector.load %arg13[%c0_43, %c0_44] : memref<64x64xbf16, #tpu.memory_space<vmem>>, vector<64x64xbf16>
    %71 = arith.extf %70 : vector<64x64xbf16> to vector<64x64xf32>
    %cst_45 = arith.constant dense<0.000000e+00> : vector<1x64xf32>
    %72 = tpu.matmul %41, %71, %cst_45 {dimension_numbers = #tpu.dot_dimension_numbers<[1], [0], [0], [1], [0, 0, 1, 1], [], []>} : vector<1x64xf32>, vector<64x64xf32>, vector<1x64xf32> -> vector<1x64xf32>
    %c0_46 = arith.constant 0 : index
    %c0_47 = arith.constant 0 : index
    %73 = vector.load %arg19[%c0_46, %c0_47] : memref<1x64xf32, #tpu.memory_space<vmem>>, vector<1x64xf32>
    %74 = arith.addf %72, %73 : vector<1x64xf32>
    %c0_48 = arith.constant 0 : index
    %c0_49 = arith.constant 0 : index
    %75 = vector.load %arg16[%c0_48, %c0_49] : memref<64x64xbf16, #tpu.memory_space<vmem>>, vector<64x64xbf16>
    %76 = arith.extf %75 : vector<64x64xbf16> to vector<64x64xf32>
    %cst_50 = arith.constant dense<0.000000e+00> : vector<1x64xf32>
    %77 = tpu.matmul %7, %76, %cst_50 {dimension_numbers = #tpu.dot_dimension_numbers<[1], [0], [0], [1], [0, 0, 1, 1], [], []>} : vector<1x64xf32>, vector<64x64xf32>, vector<1x64xf32> -> vector<1x64xf32>
    %c0_51 = arith.constant 0 : index
    %c0_52 = arith.constant 0 : index
    %78 = vector.load %arg20[%c0_51, %c0_52] : memref<1x64xf32, #tpu.memory_space<vmem>>, vector<1x64xf32>
    %79 = arith.addf %77, %78 : vector<1x64xf32>
    %80 = arith.mulf %55, %79 : vector<1x64xf32>
    %81 = arith.addf %74, %80 : vector<1x64xf32>
    %82 = math.tanh %81 : vector<1x64xf32>
    %cst_53 = arith.constant 1.000000e+00 : f32
    %83 = vector.broadcast %cst_53 : f32 to vector<1x64xf32>
    %84 = arith.subf %83, %69 : vector<1x64xf32>
    %85 = arith.mulf %84, %82 : vector<1x64xf32>
    %86 = arith.mulf %69, %7 : vector<1x64xf32>
    %87 = arith.addf %85, %86 : vector<1x64xf32>
    %c0_54 = arith.constant 0 : index
    %c0_55 = arith.constant 0 : index
    %88 = vector.load %arg26[%c0_54, %c0_55] : memref<1x64xf32, #tpu.memory_space<vmem>>, vector<1x64xf32>
    tpu.vector_store %arg26[%c0_54, %c0_55], %87 {strides = array<i32>} : memref<1x64xf32, #tpu.memory_space<vmem>>, vector<1x64xf32>,
    %89 = arith.index_cast %arg0 : i32 to index
    %c0_56 = arith.constant 0 : index
    %90 = vector.load %arg24[%89, %c0_56] : memref<8x64xf32, #tpu.memory_space<vmem>>, vector<1x64xf32>
    tpu.vector_store %arg24[%89, %c0_56], %87 {strides = array<i32>} : memref<8x64xf32, #tpu.memory_space<vmem>>, vector<1x64xf32>,
    %c0_57 = arith.constant 0 : index
    %c0_58 = arith.constant 0 : index
    %91 = vector.load %arg21[%c0_57, %c0_58] : memref<64x128xbf16, #tpu.memory_space<vmem>>, vector<64x128xbf16>
    %92 = arith.extf %91 : vector<64x128xbf16> to vector<64x128xf32>
    %cst_59 = arith.constant dense<0.000000e+00> : vector<1x128xf32>
    %93 = tpu.matmul %87, %92, %cst_59 {dimension_numbers = #tpu.dot_dimension_numbers<[1], [0], [0], [1], [0, 0, 1, 1], [], []>} : vector<1x64xf32>, vector<64x128xf32>, vector<1x128xf32> -> vector<1x128xf32>
    %c0_60 = arith.constant 0 : index
    %c0_61 = arith.constant 0 : index
    %94 = vector.load %arg22[%c0_60, %c0_61] : memref<1x128xf32, #tpu.memory_space<vmem>>, vector<1x128xf32>
    %95 = arith.addf %93, %94 : vector<1x128xf32>
    %cst_62 = arith.constant dense<0xFF800000> : vector<1xf32>
    %96 = vector.multi_reduction <maximumf>, %95, %cst_62 [1] : vector<1x128xf32> to vector<1xf32>
    %97 = vector.shape_cast %96 : vector<1xf32> to vector<1x1xf32>
    %98 = vector.broadcast %97 : vector<1x1xf32> to vector<1x128xf32>
    %99 = arith.subf %95, %98 : vector<1x128xf32>
    %100 = math.exp %99 : vector<1x128xf32>
    %cst_63 = arith.constant dense<0.000000e+00> : vector<1xf32>
    %101 = vector.multi_reduction <add>, %100, %cst_63 [1] : vector<1x128xf32> to vector<1xf32>
    %102 = vector.shape_cast %101 : vector<1xf32> to vector<1x1xf32>
    %103 = math.log %102 : vector<1x1xf32>
    %104 = vector.broadcast %103 : vector<1x1xf32> to vector<1x128xf32>
    %105 = arith.subf %99, %104 : vector<1x128xf32>
    %106 = arith.index_cast %arg0 : i32 to index
    %c0_64 = arith.constant 0 : index
    %107 = vector.load %arg23[%106, %c0_64] : memref<8x128xf32, #tpu.memory_space<vmem>>, vector<1x128xf32>
    tpu.vector_store %arg23[%106, %c0_64], %105 {strides = array<i32>} : memref<8x128xf32, #tpu.memory_space<vmem>>, vector<1x128xf32>,
    return
  }
  func.func @transform_0(%arg0: i32, %arg1: memref<8xi32, #tpu.memory_space<smem>>) -> (i32, i32) {
    %c0_i32 = arith.constant 0 : i32
    %c0_i32_0 = arith.constant 0 : i32
    %c0_i32_1 = arith.constant 0 : i32
    return %c0_i32, %c0_i32_0 : i32, i32
  }
  func.func @transform_1(%arg0: i32, %arg1: memref<8xi32, #tpu.memory_space<smem>>) -> (i32, i32) {
    %c0_i32 = arith.constant 0 : i32
    %c0_i32_0 = arith.constant 0 : i32
    %c0_i32_1 = arith.constant 0 : i32
    return %c0_i32, %c0_i32_0 : i32, i32
  }
  func.func @transform_2(%arg0: i32, %arg1: memref<8xi32, #tpu.memory_space<smem>>) -> (i32, i32) {
    %c0_i32 = arith.constant 0 : i32
    %c0_i32_0 = arith.constant 0 : i32
    %c0_i32_1 = arith.constant 0 : i32
    return %c0_i32, %c0_i32_0 : i32, i32
  }
  func.func @transform_3(%arg0: i32, %arg1: memref<8xi32, #tpu.memory_space<smem>>) -> (i32, i32) {
    %c0_i32 = arith.constant 0 : i32
    %c0_i32_0 = arith.constant 0 : i32
    %c0_i32_1 = arith.constant 0 : i32
    return %c0_i32, %c0_i32_0 : i32, i32
  }
  func.func @transform_4(%arg0: i32, %arg1: memref<8xi32, #tpu.memory_space<smem>>) -> (i32, i32) {
    %c0_i32 = arith.constant 0 : i32
    %c0_i32_0 = arith.constant 0 : i32
    %c0_i32_1 = arith.constant 0 : i32
    return %c0_i32, %c0_i32_0 : i32, i32
  }
  func.func @transform_5(%arg0: i32, %arg1: memref<8xi32, #tpu.memory_space<smem>>) -> (i32, i32) {
    %c0_i32 = arith.constant 0 : i32
    %c0_i32_0 = arith.constant 0 : i32
    %c0_i32_1 = arith.constant 0 : i32
    return %c0_i32, %c0_i32_0 : i32, i32
  }
  func.func @transform_6(%arg0: i32, %arg1: memref<8xi32, #tpu.memory_space<smem>>) -> (i32, i32) {
    %c0_i32 = arith.constant 0 : i32
    %c0_i32_0 = arith.constant 0 : i32
    %c0_i32_1 = arith.constant 0 : i32
    return %c0_i32, %c0_i32_0 : i32, i32
  }
  func.func @transform_7(%arg0: i32, %arg1: memref<8xi32, #tpu.memory_space<smem>>) -> (i32, i32) {
    %c0_i32 = arith.constant 0 : i32
    %c0_i32_0 = arith.constant 0 : i32
    %c0_i32_1 = arith.constant 0 : i32
    return %c0_i32, %c0_i32_0 : i32, i32
  }
  func.func @transform_8(%arg0: i32, %arg1: memref<8xi32, #tpu.memory_space<smem>>) -> (i32, i32) {
    %c0_i32 = arith.constant 0 : i32
    %c0_i32_0 = arith.constant 0 : i32
    %c0_i32_1 = arith.constant 0 : i32
    return %c0_i32, %c0_i32_0 : i32, i32
  }
  func.func @transform_9(%arg0: i32, %arg1: memref<8xi32, #tpu.memory_space<smem>>) -> (i32, i32) {
    %c0_i32 = arith.constant 0 : i32
    %c0_i32_0 = arith.constant 0 : i32
    %c0_i32_1 = arith.constant 0 : i32
    return %c0_i32, %c0_i32_0 : i32, i32
  }
  func.func @transform_10(%arg0: i32, %arg1: memref<8xi32, #tpu.memory_space<smem>>) -> (i32, i32) {
    %c0_i32 = arith.constant 0 : i32
    %c0_i32_0 = arith.constant 0 : i32
    %c0_i32_1 = arith.constant 0 : i32
    return %c0_i32, %c0_i32_0 : i32, i32
  }
  func.func @transform_11(%arg0: i32, %arg1: memref<8xi32, #tpu.memory_space<smem>>) -> (i32, i32) {
    %c0_i32 = arith.constant 0 : i32
    %c0_i32_0 = arith.constant 0 : i32
    %c0_i32_1 = arith.constant 0 : i32
    return %c0_i32, %c0_i32_0 : i32, i32
  }
  func.func @transform_12(%arg0: i32, %arg1: memref<8xi32, #tpu.memory_space<smem>>) -> (i32, i32) {
    %c0_i32 = arith.constant 0 : i32
    %c0_i32_0 = arith.constant 0 : i32
    %c0_i32_1 = arith.constant 0 : i32
    return %c0_i32, %c0_i32_0 : i32, i32
  }
  func.func @transform_13(%arg0: i32, %arg1: memref<8xi32, #tpu.memory_space<smem>>) -> (i32, i32) {
    %c0_i32 = arith.constant 0 : i32
    %c0_i32_0 = arith.constant 0 : i32
    %c0_i32_1 = arith.constant 0 : i32
    return %c0_i32, %c0_i32_0 : i32, i32
  }
  func.func @transform_14(%arg0: i32, %arg1: memref<8xi32, #tpu.memory_space<smem>>) -> (i32, i32) {
    %c0_i32 = arith.constant 0 : i32
    %c0_i32_0 = arith.constant 0 : i32
    %c0_i32_1 = arith.constant 0 : i32
    return %c0_i32, %c0_i32_0 : i32, i32
  }
  func.func @transform_15(%arg0: i32, %arg1: memref<8xi32, #tpu.memory_space<smem>>) -> (i32, i32) {
    %c0_i32 = arith.constant 0 : i32
    %c0_i32_0 = arith.constant 0 : i32
    %c0_i32_1 = arith.constant 0 : i32
    return %c0_i32, %c0_i32_0 : i32, i32
  }
  func.func @transform_16(%arg0: i32, %arg1: memref<8xi32, #tpu.memory_space<smem>>) -> (i32, i32) {
    %c0_i32 = arith.constant 0 : i32
    %c0_i32_0 = arith.constant 0 : i32
    %c0_i32_1 = arith.constant 0 : i32
    return %c0_i32, %c0_i32_0 : i32, i32
  }
  func.func @transform_17(%arg0: i32, %arg1: memref<8xi32, #tpu.memory_space<smem>>) -> (i32, i32) {
    %c0_i32 = arith.constant 0 : i32
    %c0_i32_0 = arith.constant 0 : i32
    %c0_i32_1 = arith.constant 0 : i32
    return %c0_i32, %c0_i32_0 : i32, i32
  }
  func.func @transform_18(%arg0: i32, %arg1: memref<8xi32, #tpu.memory_space<smem>>) -> (i32, i32) {
    %c0_i32 = arith.constant 0 : i32
    %c0_i32_0 = arith.constant 0 : i32
    %c0_i32_1 = arith.constant 0 : i32
    return %c0_i32, %c0_i32_0 : i32, i32
  }
  func.func @transform_19(%arg0: i32, %arg1: memref<8xi32, #tpu.memory_space<smem>>) -> (i32, i32) {
    %c0_i32 = arith.constant 0 : i32
    %c0_i32_0 = arith.constant 0 : i32
    %c0_i32_1 = arith.constant 0 : i32
    return %c0_i32, %c0_i32_0 : i32, i32
  }
  func.func @transform_20(%arg0: i32, %arg1: memref<8xi32, #tpu.memory_space<smem>>) -> (i32, i32) {
    %c0_i32 = arith.constant 0 : i32
    %c0_i32_0 = arith.constant 0 : i32
    %c0_i32_1 = arith.constant 0 : i32
    return %c0_i32, %c0_i32_0 : i32, i32
  }
  func.func @transform_21(%arg0: i32, %arg1: memref<8xi32, #tpu.memory_space<smem>>) -> (i32, i32) {
    %c0_i32 = arith.constant 0 : i32
    %c0_i32_0 = arith.constant 0 : i32
    %c0_i32_1 = arith.constant 0 : i32
    return %c0_i32, %c0_i32_0 : i32, i32
  }
  func.func @transform_22(%arg0: i32, %arg1: memref<8xi32, #tpu.memory_space<smem>>) -> (i32, i32) {
    %c0_i32 = arith.constant 0 : i32
    %c0_i32_0 = arith.constant 0 : i32
    %c0_i32_1 = arith.constant 0 : i32
    return %c0_i32, %c0_i32_0 : i32, i32
  }
  func.func @transform_23(%arg0: i32, %arg1: memref<8xi32, #tpu.memory_space<smem>>) -> (i32, i32) {
    %c0_i32 = arith.constant 0 : i32
    %c0_i32_0 = arith.constant 0 : i32
    %c0_i32_1 = arith.constant 0 : i32
    return %c0_i32, %c0_i32_0 : i32, i32
  }
}

</mosaic_0001>

<llo_original>
// kernel: tpu_custom_call.1
$region0: #{tpu_custom_call.1}
  #allocation0 [shape = 'u32[]', space=smem, size = 0x4, offset = 0x4, fixed_abs, tag = 'smem constant byte address 0x4 - core index']
  #allocation1 [shape = 'u32[72,128]{1,0:T(1,128)}', space=vmem, size = 0x9000, scoped, tag = 'internal scratch']
  #allocation2 [shape = 'f32[1,64]{1,0:T(1,128)}', space=vmem, size = 0x200, scoped, tag = 'scratch operand']
  #allocation3 [shape = 's32[1]{0}', space=sflag, size = 0x4, scoped, tag = 'scoped memory for tpu_custom_call.1']
  #allocation4 [shape = 'u8[512]{0}', space=smem, size = 0x200, scoped, tag = 'prefetched SMEM operand 0']
  %s0 = inlined_call_operand.hbm [shape: s32[8], index: 0, kind: input, shape index: {}]
  %s1 = inlined_call_operand.vmem [shape: f32[128,64], index: 1, kind: input, shape index: {}]
  %s2 = inlined_call_operand.hbm [shape: f32[1,64], index: 2, kind: input, shape index: {}]
  %s3 = inlined_call_operand.vmem [shape: f32[128,64], index: 3, kind: input, shape index: {}]
  %s4 = inlined_call_operand.vmem [shape: bf16[64,128], index: 4, kind: input, shape index: {}]
  %s5 = inlined_call_operand.vmem [shape: bf16[64,128], index: 5, kind: input, shape index: {}]
  %s6 = inlined_call_operand.vmem [shape: f32[1,128], index: 6, kind: input, shape index: {}]
  %s7 = inlined_call_operand.vmem [shape: bf16[64,64], index: 7, kind: input, shape index: {}]
  %s8 = inlined_call_operand.vmem [shape: bf16[64,64], index: 8, kind: input, shape index: {}]
  %s9 = inlined_call_operand.vmem [shape: f32[1,64], index: 9, kind: input, shape index: {}]
  %s10 = inlined_call_operand.vmem [shape: bf16[64,64], index: 10, kind: input, shape index: {}]
  %s11 = inlined_call_operand.vmem [shape: bf16[64,64], index: 11, kind: input, shape index: {}]
  %s12 = inlined_call_operand.vmem [shape: bf16[64,64], index: 12, kind: input, shape index: {}]
  %s13 = inlined_call_operand.vmem [shape: bf16[64,64], index: 13, kind: input, shape index: {}]
  %s14 = inlined_call_operand.vmem [shape: bf16[64,64], index: 14, kind: input, shape index: {}]
  %s15 = inlined_call_operand.vmem [shape: bf16[64,64], index: 15, kind: input, shape index: {}]
  %s16 = inlined_call_operand.vmem [shape: f32[1,64], index: 16, kind: input, shape index: {}]
  %s17 = inlined_call_operand.vmem [shape: f32[1,64], index: 17, kind: input, shape index: {}]
  %s18 = inlined_call_operand.vmem [shape: f32[1,64], index: 18, kind: input, shape index: {}]
  %s19 = inlined_call_operand.vmem [shape: f32[1,64], index: 19, kind: input, shape index: {}]
  %s20 = inlined_call_operand.hbm [shape: bf16[64,128], index: 20, kind: input, shape index: {}]
  %s21 = inlined_call_operand.vmem [shape: f32[1,128], index: 21, kind: input, shape index: {}]
  %s22 = inlined_call_operand.hbm [shape: f32[8,128], index: 22, kind: output, shape index: {0}]
  %s23 = inlined_call_operand.hbm [shape: f32[8,64], index: 23, kind: output, shape index: {1}]
  %s24 = inlined_call_operand.hbm [shape: f32[8,128], index: 24, kind: output, shape index: {2}]
  %25 = xla_tuple %s22, %s23, %s24
  %s26 = sld [smem:[#allocation0]]
  $region145: #{tpu_custom_call.1} parent=0
    _
  %s28 = ssub.s32 1, %s26
  %s29 = scalar_select 0, %s28, %s26
  %s31 = sshll.u32 %s0, 4
  %s32 = int_to_ptr.hbm [resolvable:$true] %s31
  %34 = dma.hbm_to_smem %s32, 16, [#allocation4], [#allocation3]
  %36 = dma.done [#allocation3], 16
  %37 = sfence
  $region1: #{tpu_custom_call.1} parent=0
    #allocation5 [shape = 'u8[512]{0}', space=vmem, size = 0x400, scoped, tag = 'input window, operand 2, single buffered']
    #allocation6 [shape = 's32[2]{0}', space=sflag, size = 0x8, scoped, tag = 'scoped memory for tpu_custom_call.1']
    #allocation7 [shape = 's32[2]{0}', space=sflag, size = 0x8, scoped, tag = 'scoped memory for tpu_custom_call.1']
    #allocation8 [shape = 'u8[16384]{0}', space=vmem, size = 0x4000, scoped, tag = 'input window, operand 20, single buffered']
    #allocation9 [shape = 's32[1]{0}', space=sflag, size = 0x4, scoped, tag = 'scoped memory for tpu_custom_call.1']
    #allocation10 [shape = 'u8[4096]{0}', space=vmem, size = 0x1000, scoped, tag = 'output window, operand 0, single buffered']
    #allocation11 [shape = 'u8[4096]{0}', space=vmem, size = 0x1000, scoped, tag = 'output window, operand 1, single buffered']
    #allocation12 [shape = 's32[1]{0}', space=sflag, size = 0x4, scoped, tag = 'scoped memory for tpu_custom_call.1']
    #allocation13 [shape = 'u8[4096]{0}', space=vmem, size = 0x1000, scoped, tag = 'output window, operand 2, single buffered']
    %38 = vsyncpa [#allocation6], 0
    %39 = vsyncpa [#allocation9], 0
    %40 = vsyncpa [#allocation7], 0
    %41 = vsyncpa [#allocation12], 0
    loop: start=0, step=1, limit=10
    $region2: #{tpu_custom_call.1} parent=1 // loop_pre_header
      _
    $region3: #{tpu_custom_call.1} parent=1 // loop_header
      %s43 = sphi 0, %s47
      %p44 = scmp.ge.s32.totalorder %s43, 10
      %s51 = sphi 0, %s51
      %s53 = sphi 0, %s51
      %s54 = sphi 0, %s53
      %s68 = sphi 0, %s54
      %s72 = sphi 0, %s72
      %s74 = sphi 0, %s72
      %s75 = sphi 0, %s74
      %s89 = sphi 0, %s75
      %s93 = sphi 0, %s93
      %s95 = sphi 0, %s93
      %s96 = sphi 0, %s95
      %s110 = sphi 0, %s96
      %s114 = sphi 0, %s114
      %s116 = sphi 0, %s114
      %s117 = sphi 0, %s116
      %s131 = sphi 0, %s117
      %s135 = sphi 0, %s135
      %s137 = sphi 0, %s135
      %s138 = sphi 0, %s137
      %s152 = sphi 0, %s138
      %s156 = sphi 0, %s156
      %s158 = sphi 0, %s156
      %s159 = sphi 0, %s158
      %s173 = sphi 0, %s159
      %s177 = sphi 0, %s177
      %s179 = sphi 0, %s177
      %s180 = sphi 0, %s179
      %s194 = sphi 0, %s180
      %s198 = sphi 0, %s198
      %s200 = sphi 0, %s198
      %s201 = sphi 0, %s200
      %s215 = sphi 0, %s201
      %s219 = sphi 0, %s219
      %s221 = sphi 0, %s219
      %s222 = sphi 0, %s221
      %s236 = sphi 0, %s222
      %s240 = sphi 0, %s240
      %s242 = sphi 0, %s240
      %s243 = sphi 0, %s242
      %s257 = sphi 0, %s243
      %s261 = sphi 0, %s261
      %s263 = sphi 0, %s261
      %s264 = sphi 0, %s263
      %s278 = sphi 0, %s264
      %s282 = sphi 0, %s282
      %s284 = sphi 0, %s282
      %s285 = sphi 0, %s284
      %s299 = sphi 0, %s285
      %s303 = sphi 0, %s303
      %s305 = sphi 0, %s303
      %s306 = sphi 0, %s305
      %s320 = sphi 0, %s306
      %s324 = sphi 0, %s324
      %s326 = sphi 0, %s324
      %s327 = sphi 0, %s326
      %s341 = sphi 0, %s327
      %s345 = sphi 0, %s345
      %s347 = sphi 0, %s345
      %s348 = sphi 0, %s347
      %s362 = sphi 0, %s348
      %s366 = sphi 0, %s366
      %s368 = sphi 0, %s366
      %s369 = sphi 0, %s368
      %s383 = sphi 0, %s369
      %s387 = sphi 0, %s387
      %s389 = sphi 0, %s387
      %s390 = sphi 0, %s389
      %s404 = sphi 0, %s390
      %s408 = sphi 0, %s408
      %s410 = sphi 0, %s408
      %s411 = sphi 0, %s410
      %s425 = sphi 0, %s411
      %s429 = sphi 0, %s429
      %s431 = sphi 0, %s429
      %s432 = sphi 0, %s431
      %s446 = sphi 0, %s432
      %s450 = sphi 0, %s450
      %s452 = sphi 0, %s450
      %s453 = sphi 0, %s452
      %s467 = sphi 0, %s453
      %s471 = sphi 0, %s471
      %s473 = sphi 0, %s471
      %s474 = sphi 0, %s473
      %s488 = sphi 0, %s474
      %s492 = sphi 0, %s492
      %s494 = sphi 0, %s492
      %s495 = sphi 0, %s494
      %s509 = sphi 0, %s495
      %s513 = sphi 0, %s513
      %s515 = sphi 0, %s513
      %s516 = sphi 0, %s515
      %s530 = sphi 0, %s516
      %s534 = sphi 0, %s534
      %s536 = sphi 0, %s534
      %s537 = sphi 0, %s536
      %s551 = sphi 0, %s537
    $region4: #{tpu_custom_call.1} parent=1 // loop_header_branch
      %46 = sbr.rel (%p44) target = $region8
    $region5: #{tpu_custom_call.1} parent=1 // loop_body
      %s48 = ssub.s32 %s43, 1
      %s49 = ssub.s32 %s43, 2
      %s50 = sadd.s32 %s43, 1
      %s52 = sadd.s32 %s51, 1
      %p55 = scmp.eq.s32.totalorder %s43, 7
      %p56 = scmp.ne.s32.totalorder %s51, %s53
      %p57 = scmp.eq.s32.totalorder %s43, 0
      %p58 = por %p56, %p57
      %p59 = scmp.ne.s32.totalorder %s51, %s53
      %p60 = scmp.eq.s32.totalorder %s48, 7
      %p61 = por %p59, %p60
      %p62 = scmp.ne.s32.totalorder %s53, %s54
      %p63 = scmp.eq.s32.totalorder %s48, 0
      %p64 = por %p62, %p63
      %p65 = scmp.ne.s32.totalorder %s53, %s54
      %p66 = scmp.eq.s32.totalorder %s49, 7
      %p67 = por %p65, %p66
      %p69 = scmp.ne.s32.totalorder %s54, %s68
      %p70 = scmp.eq.s32.totalorder %s49, 0
      %p71 = por %p69, %p70
      %s73 = sadd.s32 %s72, 1
      %p76 = scmp.eq.s32.totalorder %s43, 7
      %p77 = scmp.ne.s32.totalorder %s72, %s74
      %p78 = scmp.eq.s32.totalorder %s43, 0
      %p79 = por %p77, %p78
      %p80 = scmp.ne.s32.totalorder %s72, %s74
      %p81 = scmp.eq.s32.totalorder %s48, 7
      %p82 = por %p80, %p81
      %p83 = scmp.ne.s32.totalorder %s74, %s75
      %p84 = scmp.eq.s32.totalorder %s48, 0
      %p85 = por %p83, %p84
      %p86 = scmp.ne.s32.totalorder %s74, %s75
      %p87 = scmp.eq.s32.totalorder %s49, 7
      %p88 = por %p86, %p87
      %p90 = scmp.ne.s32.totalorder %s75, %s89
      %p91 = scmp.eq.s32.totalorder %s49, 0
      %p92 = por %p90, %p91
      %s94 = sadd.s32 %s93, 1
      %p97 = scmp.eq.s32.totalorder %s43, 7
      %p98 = scmp.ne.s32.totalorder %s93, %s95
      %p99 = scmp.eq.s32.totalorder %s43, 0
      %p100 = por %p98, %p99
      %p101 = scmp.ne.s32.totalorder %s93, %s95
      %p102 = scmp.eq.s32.totalorder %s48, 7
      %p103 = por %p101, %p102
      %p104 = scmp.ne.s32.totalorder %s95, %s96
      %p105 = scmp.eq.s32.totalorder %s48, 0
      %p106 = por %p104, %p105
      %p107 = scmp.ne.s32.totalorder %s95, %s96
      %p108 = scmp.eq.s32.totalorder %s49, 7
      %p109 = por %p107, %p108
      %p111 = scmp.ne.s32.totalorder %s96, %s110
      %p112 = scmp.eq.s32.totalorder %s49, 0
      %p113 = por %p111, %p112
      %s115 = sadd.s32 %s114, 1
      %p118 = scmp.eq.s32.totalorder %s43, 7
      %p119 = scmp.ne.s32.totalorder %s114, %s116
      %p120 = scmp.eq.s32.totalorder %s43, 0
      %p121 = por %p119, %p120
      %p122 = scmp.ne.s32.totalorder %s114, %s116
      %p123 = scmp.eq.s32.totalorder %s48, 7
      %p124 = por %p122, %p123
      %p125 = scmp.ne.s32.totalorder %s116, %s117
      %p126 = scmp.eq.s32.totalorder %s48, 0
      %p127 = por %p125, %p126
      %p128 = scmp.ne.s32.totalorder %s116, %s117
      %p129 = scmp.eq.s32.totalorder %s49, 7
      %p130 = por %p128, %p129
      %p132 = scmp.ne.s32.totalorder %s117, %s131
      %p133 = scmp.eq.s32.totalorder %s49, 0
      %p134 = por %p132, %p133
      %s136 = sadd.s32 %s135, 1
      %p139 = scmp.eq.s32.totalorder %s43, 7
      %p140 = scmp.ne.s32.totalorder %s135, %s137
      %p141 = scmp.eq.s32.totalorder %s43, 0
      %p142 = por %p140, %p141
      %p143 = scmp.ne.s32.totalorder %s135, %s137
      %p144 = scmp.eq.s32.totalorder %s48, 7
      %p145 = por %p143, %p144
      %p146 = scmp.ne.s32.totalorder %s137, %s138
      %p147 = scmp.eq.s32.totalorder %s48, 0
      %p148 = por %p146, %p147
      %p149 = scmp.ne.s32.totalorder %s137, %s138
      %p150 = scmp.eq.s32.totalorder %s49, 7
      %p151 = por %p149, %p150
      %p153 = scmp.ne.s32.totalorder %s138, %s152
      %p154 = scmp.eq.s32.totalorder %s49, 0
      %p155 = por %p153, %p154
      %s157 = sadd.s32 %s156, 1
      %p160 = scmp.eq.s32.totalorder %s43, 7
      %p161 = scmp.ne.s32.totalorder %s156, %s158
      %p162 = scmp.eq.s32.totalorder %s43, 0
      %p163 = por %p161, %p162
      %p164 = scmp.ne.s32.totalorder %s156, %s158
      %p165 = scmp.eq.s32.totalorder %s48, 7
      %p166 = por %p164, %p165
      %p167 = scmp.ne.s32.totalorder %s158, %s159
      %p168 = scmp.eq.s32.totalorder %s48, 0
      %p169 = por %p167, %p168
      %p170 = scmp.ne.s32.totalorder %s158, %s159
      %p171 = scmp.eq.s32.totalorder %s49, 7
      %p172 = por %p170, %p171
      %p174 = scmp.ne.s32.totalorder %s159, %s173
      %p175 = scmp.eq.s32.totalorder %s49, 0
      %p176 = por %p174, %p175
      %s178 = sadd.s32 %s177, 1
      %p181 = scmp.eq.s32.totalorder %s43, 7
      %p182 = scmp.ne.s32.totalorder %s177, %s179
      %p183 = scmp.eq.s32.totalorder %s43, 0
      %p184 = por %p182, %p183
      %p185 = scmp.ne.s32.totalorder %s177, %s179
      %p186 = scmp.eq.s32.totalorder %s48, 7
      %p187 = por %p185, %p186
      %p188 = scmp.ne.s32.totalorder %s179, %s180
      %p189 = scmp.eq.s32.totalorder %s48, 0
      %p190 = por %p188, %p189
      %p191 = scmp.ne.s32.totalorder %s179, %s180
      %p192 = scmp.eq.s32.totalorder %s49, 7
      %p193 = por %p191, %p192
      %p195 = scmp.ne.s32.totalorder %s180, %s194
      %p196 = scmp.eq.s32.totalorder %s49, 0
      %p197 = por %p195, %p196
      %s199 = sadd.s32 %s198, 1
      %p202 = scmp.eq.s32.totalorder %s43, 7
      %p203 = scmp.ne.s32.totalorder %s198, %s200
      %p204 = scmp.eq.s32.totalorder %s43, 0
      %p205 = por %p203, %p204
      %p206 = scmp.ne.s32.totalorder %s198, %s200
      %p207 = scmp.eq.s32.totalorder %s48, 7
      %p208 = por %p206, %p207
      %p209 = scmp.ne.s32.totalorder %s200, %s201
      %p210 = scmp.eq.s32.totalorder %s48, 0
      %p211 = por %p209, %p210
      %p212 = scmp.ne.s32.totalorder %s200, %s201
      %p213 = scmp.eq.s32.totalorder %s49, 7
      %p214 = por %p212, %p213
      %p216 = scmp.ne.s32.totalorder %s201, %s215
      %p217 = scmp.eq.s32.totalorder %s49, 0
      %p218 = por %p216, %p217
      %s220 = sadd.s32 %s219, 1
      %p223 = scmp.eq.s32.totalorder %s43, 7
      %p224 = scmp.ne.s32.totalorder %s219, %s221
      %p225 = scmp.eq.s32.totalorder %s43, 0
      %p226 = por %p224, %p225
      %p227 = scmp.ne.s32.totalorder %s219, %s221
      %p228 = scmp.eq.s32.totalorder %s48, 7
      %p229 = por %p227, %p228
      %p230 = scmp.ne.s32.totalorder %s221, %s222
      %p231 = scmp.eq.s32.totalorder %s48, 0
      %p232 = por %p230, %p231
      %p233 = scmp.ne.s32.totalorder %s221, %s222
      %p234 = scmp.eq.s32.totalorder %s49, 7
      %p235 = por %p233, %p234
      %p237 = scmp.ne.s32.totalorder %s222, %s236
      %p238 = scmp.eq.s32.totalorder %s49, 0
      %p239 = por %p237, %p238
      %s241 = sadd.s32 %s240, 1
      %p244 = scmp.eq.s32.totalorder %s43, 7
      %p245 = scmp.ne.s32.totalorder %s240, %s242
      %p246 = scmp.eq.s32.totalorder %s43, 0
      %p247 = por %p245, %p246
      %p248 = scmp.ne.s32.totalorder %s240, %s242
      %p249 = scmp.eq.s32.totalorder %s48, 7
      %p250 = por %p248, %p249
      %p251 = scmp.ne.s32.totalorder %s242, %s243
      %p252 = scmp.eq.s32.totalorder %s48, 0
      %p253 = por %p251, %p252
      %p254 = scmp.ne.s32.totalorder %s242, %s243
      %p255 = scmp.eq.s32.totalorder %s49, 7
      %p256 = por %p254, %p255
      %p258 = scmp.ne.s32.totalorder %s243, %s257
      %p259 = scmp.eq.s32.totalorder %s49, 0
      %p260 = por %p258, %p259
      %s262 = sadd.s32 %s261, 1
      %p265 = scmp.eq.s32.totalorder %s43, 7
      %p266 = scmp.ne.s32.totalorder %s261, %s263
      %p267 = scmp.eq.s32.totalorder %s43, 0
      %p268 = por %p266, %p267
      %p269 = scmp.ne.s32.totalorder %s261, %s263
      %p270 = scmp.eq.s32.totalorder %s48, 7
      %p271 = por %p269, %p270
      %p272 = scmp.ne.s32.totalorder %s263, %s264
      %p273 = scmp.eq.s32.totalorder %s48, 0
      %p274 = por %p272, %p273
      %p275 = scmp.ne.s32.totalorder %s263, %s264
      %p276 = scmp.eq.s32.totalorder %s49, 7
      %p277 = por %p275, %p276
      %p279 = scmp.ne.s32.totalorder %s264, %s278
      %p280 = scmp.eq.s32.totalorder %s49, 0
      %p281 = por %p279, %p280
      %s283 = sadd.s32 %s282, 1
      %p286 = scmp.eq.s32.totalorder %s43, 7
      %p287 = scmp.ne.s32.totalorder %s282, %s284
      %p288 = scmp.eq.s32.totalorder %s43, 0
      %p289 = por %p287, %p288
      %p290 = scmp.ne.s32.totalorder %s282, %s284
      %p291 = scmp.eq.s32.totalorder %s48, 7
      %p292 = por %p290, %p291
      %p293 = scmp.ne.s32.totalorder %s284, %s285
      %p294 = scmp.eq.s32.totalorder %s48, 0
      %p295 = por %p293, %p294
      %p296 = scmp.ne.s32.totalorder %s284, %s285
      %p297 = scmp.eq.s32.totalorder %s49, 7
      %p298 = por %p296, %p297
      %p300 = scmp.ne.s32.totalorder %s285, %s299
      %p301 = scmp.eq.s32.totalorder %s49, 0
      %p302 = por %p300, %p301
      %s304 = sadd.s32 %s303, 1
      %p307 = scmp.eq.s32.totalorder %s43, 7
      %p308 = scmp.ne.s32.totalorder %s303, %s305
      %p309 = scmp.eq.s32.totalorder %s43, 0
      %p310 = por %p308, %p309
      %p311 = scmp.ne.s32.totalorder %s303, %s305
      %p312 = scmp.eq.s32.totalorder %s48, 7
      %p313 = por %p311, %p312
      %p314 = scmp.ne.s32.totalorder %s305, %s306
      %p315 = scmp.eq.s32.totalorder %s48, 0
      %p316 = por %p314, %p315
      %p317 = scmp.ne.s32.totalorder %s305, %s306
      %p318 = scmp.eq.s32.totalorder %s49, 7
      %p319 = por %p317, %p318
      %p321 = scmp.ne.s32.totalorder %s306, %s320
      %p322 = scmp.eq.s32.totalorder %s49, 0
      %p323 = por %p321, %p322
      %s325 = sadd.s32 %s324, 1
      %p328 = scmp.eq.s32.totalorder %s43, 7
      %p329 = scmp.ne.s32.totalorder %s324, %s326
      %p330 = scmp.eq.s32.totalorder %s43, 0
      %p331 = por %p329, %p330
      %p332 = scmp.ne.s32.totalorder %s324, %s326
      %p333 = scmp.eq.s32.totalorder %s48, 7
      %p334 = por %p332, %p333
      %p335 = scmp.ne.s32.totalorder %s326, %s327
      %p336 = scmp.eq.s32.totalorder %s48, 0
      %p337 = por %p335, %p336
      %p338 = scmp.ne.s32.totalorder %s326, %s327
      %p339 = scmp.eq.s32.totalorder %s49, 7
      %p340 = por %p338, %p339
      %p342 = scmp.ne.s32.totalorder %s327, %s341
      %p343 = scmp.eq.s32.totalorder %s49, 0
      %p344 = por %p342, %p343
      %s346 = sadd.s32 %s345, 1
      %p349 = scmp.eq.s32.totalorder %s43, 7
      %p350 = scmp.ne.s32.totalorder %s345, %s347
      %p351 = scmp.eq.s32.totalorder %s43, 0
      %p352 = por %p350, %p351
      %p353 = scmp.ne.s32.totalorder %s345, %s347
      %p354 = scmp.eq.s32.totalorder %s48, 7
      %p355 = por %p353, %p354
      %p356 = scmp.ne.s32.totalorder %s347, %s348
      %p357 = scmp.eq.s32.totalorder %s48, 0
      %p358 = por %p356, %p357
      %p359 = scmp.ne.s32.totalorder %s347, %s348
      %p360 = scmp.eq.s32.totalorder %s49, 7
      %p361 = por %p359, %p360
      %p363 = scmp.ne.s32.totalorder %s348, %s362
      %p364 = scmp.eq.s32.totalorder %s49, 0
      %p365 = por %p363, %p364
      %s367 = sadd.s32 %s366, 1
      %p370 = scmp.eq.s32.totalorder %s43, 7
      %p371 = scmp.ne.s32.totalorder %s366, %s368
      %p372 = scmp.eq.s32.totalorder %s43, 0
      %p373 = por %p371, %p372
      %p374 = scmp.ne.s32.totalorder %s366, %s368
      %p375 = scmp.eq.s32.totalorder %s48, 7
      %p376 = por %p374, %p375
      %p377 = scmp.ne.s32.totalorder %s368, %s369
      %p378 = scmp.eq.s32.totalorder %s48, 0
      %p379 = por %p377, %p378
      %p380 = scmp.ne.s32.totalorder %s368, %s369
      %p381 = scmp.eq.s32.totalorder %s49, 7
      %p382 = por %p380, %p381
      %p384 = scmp.ne.s32.totalorder %s369, %s383
      %p385 = scmp.eq.s32.totalorder %s49, 0
      %p386 = por %p384, %p385
      %s388 = sadd.s32 %s387, 1
      %p391 = scmp.eq.s32.totalorder %s43, 7
      %p392 = scmp.ne.s32.totalorder %s387, %s389
      %p393 = scmp.eq.s32.totalorder %s43, 0
      %p394 = por %p392, %p393
      %p395 = scmp.ne.s32.totalorder %s387, %s389
      %p396 = scmp.eq.s32.totalorder %s48, 7
      %p397 = por %p395, %p396
      %p398 = scmp.ne.s32.totalorder %s389, %s390
      %p399 = scmp.eq.s32.totalorder %s48, 0
      %p400 = por %p398, %p399
      %p401 = scmp.ne.s32.totalorder %s389, %s390
      %p402 = scmp.eq.s32.totalorder %s49, 7
      %p403 = por %p401, %p402
      %p405 = scmp.ne.s32.totalorder %s390, %s404
      %p406 = scmp.eq.s32.totalorder %s49, 0
      %p407 = por %p405, %p406
      %s409 = sadd.s32 %s408, 1
      %p412 = scmp.eq.s32.totalorder %s43, 7
      %p413 = scmp.ne.s32.totalorder %s408, %s410
      %p414 = scmp.eq.s32.totalorder %s43, 0
      %p415 = por %p413, %p414
      %p416 = scmp.ne.s32.totalorder %s408, %s410
      %p417 = scmp.eq.s32.totalorder %s48, 7
      %p418 = por %p416, %p417
      %p419 = scmp.ne.s32.totalorder %s410, %s411
      %p420 = scmp.eq.s32.totalorder %s48, 0
      %p421 = por %p419, %p420
      %p422 = scmp.ne.s32.totalorder %s410, %s411
      %p423 = scmp.eq.s32.totalorder %s49, 7
      %p424 = por %p422, %p423
      %p426 = scmp.ne.s32.totalorder %s411, %s425
      %p427 = scmp.eq.s32.totalorder %s49, 0
      %p428 = por %p426, %p427
      %s430 = sadd.s32 %s429, 1
      %p433 = scmp.eq.s32.totalorder %s43, 7
      %p434 = scmp.ne.s32.totalorder %s429, %s431
      %p435 = scmp.eq.s32.totalorder %s43, 0
      %p436 = por %p434, %p435
      %p437 = scmp.ne.s32.totalorder %s429, %s431
      %p438 = scmp.eq.s32.totalorder %s48, 7
      %p439 = por %p437, %p438
      %p440 = scmp.ne.s32.totalorder %s431, %s432
      %p441 = scmp.eq.s32.totalorder %s48, 0
      %p442 = por %p440, %p441
      %p443 = scmp.ne.s32.totalorder %s431, %s432
      %p444 = scmp.eq.s32.totalorder %s49, 7
      %p445 = por %p443, %p444
      %p447 = scmp.ne.s32.totalorder %s432, %s446
      %p448 = scmp.eq.s32.totalorder %s49, 0
      %p449 = por %p447, %p448
      %s451 = sadd.s32 %s450, 1
      %p454 = scmp.eq.s32.totalorder %s43, 7
      %p455 = scmp.ne.s32.totalorder %s450, %s452
      %p456 = scmp.eq.s32.totalorder %s43, 0
      %p457 = por %p455, %p456
      %p458 = scmp.ne.s32.totalorder %s450, %s452
      %p459 = scmp.eq.s32.totalorder %s48, 7
      %p460 = por %p458, %p459
      %p461 = scmp.ne.s32.totalorder %s452, %s453
      %p462 = scmp.eq.s32.totalorder %s48, 0
      %p463 = por %p461, %p462
      %p464 = scmp.ne.s32.totalorder %s452, %s453
      %p465 = scmp.eq.s32.totalorder %s49, 7
      %p466 = por %p464, %p465
      %p468 = scmp.ne.s32.totalorder %s453, %s467
      %p469 = scmp.eq.s32.totalorder %s49, 0
      %p470 = por %p468, %p469
      %s472 = sadd.s32 %s471, 1
      %p475 = scmp.eq.s32.totalorder %s43, 7
      %p476 = scmp.ne.s32.totalorder %s471, %s473
      %p477 = scmp.eq.s32.totalorder %s43, 0
      %p478 = por %p476, %p477
      %p479 = scmp.ne.s32.totalorder %s471, %s473
      %p480 = scmp.eq.s32.totalorder %s48, 7
      %p481 = por %p479, %p480
      %p482 = scmp.ne.s32.totalorder %s473, %s474
      %p483 = scmp.eq.s32.totalorder %s48, 0
      %p484 = por %p482, %p483
      %p485 = scmp.ne.s32.totalorder %s473, %s474
      %p486 = scmp.eq.s32.totalorder %s49, 7
      %p487 = por %p485, %p486
      %p489 = scmp.ne.s32.totalorder %s474, %s488
      %p490 = scmp.eq.s32.totalorder %s49, 0
      %p491 = por %p489, %p490
      %s493 = sadd.s32 %s492, 1
      %p496 = scmp.eq.s32.totalorder %s43, 7
      %p497 = scmp.ne.s32.totalorder %s492, %s494
      %p498 = scmp.eq.s32.totalorder %s43, 0
      %p499 = por %p497, %p498
      %p500 = scmp.ne.s32.totalorder %s492, %s494
      %p501 = scmp.eq.s32.totalorder %s48, 7
      %p502 = por %p500, %p501
      %p503 = scmp.ne.s32.totalorder %s494, %s495
      %p504 = scmp.eq.s32.totalorder %s48, 0
      %p505 = por %p503, %p504
      %p506 = scmp.ne.s32.totalorder %s494, %s495
      %p507 = scmp.eq.s32.totalorder %s49, 7
      %p508 = por %p506, %p507
      %p510 = scmp.ne.s32.totalorder %s495, %s509
      %p511 = scmp.eq.s32.totalorder %s49, 0
      %p512 = por %p510, %p511
      %s514 = sadd.s32 %s513, 1
      %p517 = scmp.eq.s32.totalorder %s43, 7
      %p518 = scmp.ne.s32.totalorder %s513, %s515
      %p519 = scmp.eq.s32.totalorder %s43, 0
      %p520 = por %p518, %p519
      %p521 = scmp.ne.s32.totalorder %s513, %s515
      %p522 = scmp.eq.s32.totalorder %s48, 7
      %p523 = por %p521, %p522
      %p524 = scmp.ne.s32.totalorder %s515, %s516
      %p525 = scmp.eq.s32.totalorder %s48, 0
      %p526 = por %p524, %p525
      %p527 = scmp.ne.s32.totalorder %s515, %s516
      %p528 = scmp.eq.s32.totalorder %s49, 7
      %p529 = por %p527, %p528
      %p531 = scmp.ne.s32.totalorder %s516, %s530
      %p532 = scmp.eq.s32.totalorder %s49, 0
      %p533 = por %p531, %p532
      %s535 = sadd.s32 %s534, 1
      %p538 = scmp.eq.s32.totalorder %s43, 7
      %p539 = scmp.ne.s32.totalorder %s534, %s536
      %p540 = scmp.eq.s32.totalorder %s43, 0
      %p541 = por %p539, %p540
      %p542 = scmp.ne.s32.totalorder %s534, %s536
      %p543 = scmp.eq.s32.totalorder %s48, 7
      %p544 = por %p542, %p543
      %p545 = scmp.ne.s32.totalorder %s536, %s537
      %p546 = scmp.eq.s32.totalorder %s48, 0
      %p547 = por %p545, %p546
      %p548 = scmp.ne.s32.totalorder %s536, %s537
      %p549 = scmp.eq.s32.totalorder %s49, 7
      %p550 = por %p548, %p549
      %p552 = scmp.ne.s32.totalorder %s537, %s551
      %p553 = scmp.eq.s32.totalorder %s49, 0
      %p554 = por %p552, %p553
      %p555 = scmp.le.s32.totalorder 1, %s43
      %p556 = scmp.lt.s32.totalorder %s43, 9
      %p557 = pnand %p555, %p556
      %p558 = pneg %p557
      // Predicated region
      $region9: #{tpu_custom_call.1} parent=5 // pred_check
        _
      $region10: #{tpu_custom_call.1} parent=5 // pred_check_branch
        %560 = sbr.rel (%p557) target = $region12
      $region11: #{tpu_custom_call.1} parent=5 // pred_region
        %s561 = ssub.s32 %s43, 1
        // Predicated region
        $region13: #{tpu_custom_call.1} parent=11 // pred_check
          %p562 = pneg %p64
        $region14: #{tpu_custom_call.1} parent=11 // pred_check_branch
          %564 = sbr.rel (%p562) target = $region16
        $region15: #{tpu_custom_call.1} parent=11 // pred_region
          _
        $region16: #{tpu_custom_call.1} parent=11 // pred_fallthru
          _
        // Predicated region
        $region17: #{tpu_custom_call.1} parent=11 // pred_check
          %p565 = pneg %p85
        $region18: #{tpu_custom_call.1} parent=11 // pred_check_branch
          %567 = sbr.rel (%p565) target = $region20
        $region19: #{tpu_custom_call.1} parent=11 // pred_region
          %569 = vsyncadd [#allocation6], 0
          %s571 = sshll.u32 %s2, 4
          %s572 = int_to_ptr.hbm [resolvable:$true] %s571
          %s573 = sshll.u32 [#allocation5], 4
          %s574 = int_to_ptr.vmem [resolvable:$true] %s573
          %576 = dma.hbm_to_vmem [thread:$0]  %s572, 16, %s574, [#allocation6]
        $region20: #{tpu_custom_call.1} parent=11 // pred_fallthru
          _
        // Predicated region
        $region21: #{tpu_custom_call.1} parent=11 // pred_check
          %p577 = pneg %p106
        $region22: #{tpu_custom_call.1} parent=11 // pred_check_branch
          %579 = sbr.rel (%p577) target = $region24
        $region23: #{tpu_custom_call.1} parent=11 // pred_region
          _
        $region24: #{tpu_custom_call.1} parent=11 // pred_fallthru
          _
        // Predicated region
        $region25: #{tpu_custom_call.1} parent=11 // pred_check
          %p580 = pneg %p127
        $region26: #{tpu_custom_call.1} parent=11 // pred_check_branch
          %582 = sbr.rel (%p580) target = $region28
        $region27: #{tpu_custom_call.1} parent=11 // pred_region
          _
        $region28: #{tpu_custom_call.1} parent=11 // pred_fallthru
          _
        // Predicated region
        $region29: #{tpu_custom_call.1} parent=11 // pred_check
          %p583 = pneg %p148
        $region30: #{tpu_custom_call.1} parent=11 // pred_check_branch
          %585 = sbr.rel (%p583) target = $region32
        $region31: #{tpu_custom_call.1} parent=11 // pred_region
          _
        $region32: #{tpu_custom_call.1} parent=11 // pred_fallthru
          _
        // Predicated region
        $region33: #{tpu_custom_call.1} parent=11 // pred_check
          %p586 = pneg %p169
        $region34: #{tpu_custom_call.1} parent=11 // pred_check_branch
          %588 = sbr.rel (%p586) target = $region36
        $region35: #{tpu_custom_call.1} parent=11 // pred_region
          _
        $region36: #{tpu_custom_call.1} parent=11 // pred_fallthru
          _
        // Predicated region
        $region37: #{tpu_custom_call.1} parent=11 // pred_check
          %p589 = pneg %p190
        $region38: #{tpu_custom_call.1} parent=11 // pred_check_branch
          %591 = sbr.rel (%p589) target = $region40
        $region39: #{tpu_custom_call.1} parent=11 // pred_region
          _
        $region40: #{tpu_custom_call.1} parent=11 // pred_fallthru
          _
        // Predicated region
        $region41: #{tpu_custom_call.1} parent=11 // pred_check
          %p592 = pneg %p211
        $region42: #{tpu_custom_call.1} parent=11 // pred_check_branch
          %594 = sbr.rel (%p592) target = $region44
        $region43: #{tpu_custom_call.1} parent=11 // pred_region
          _
        $region44: #{tpu_custom_call.1} parent=11 // pred_fallthru
          _
        // Predicated region
        $region45: #{tpu_custom_call.1} parent=11 // pred_check
          %p595 = pneg %p232
        $region46: #{tpu_custom_call.1} parent=11 // pred_check_branch
          %597 = sbr.rel (%p595) target = $region48
        $region47: #{tpu_custom_call.1} parent=11 // pred_region
          _
        $region48: #{tpu_custom_call.1} parent=11 // pred_fallthru
          _
        // Predicated region
        $region49: #{tpu_custom_call.1} parent=11 // pred_check
          %p598 = pneg %p253
        $region50: #{tpu_custom_call.1} parent=11 // pred_check_branch
          %600 = sbr.rel (%p598) target = $region52
        $region51: #{tpu_custom_call.1} parent=11 // pred_region
          _
        $region52: #{tpu_custom_call.1} parent=11 // pred_fallthru
          _
        // Predicated region
        $region53: #{tpu_custom_call.1} parent=11 // pred_check
          %p601 = pneg %p274
        $region54: #{tpu_custom_call.1} parent=11 // pred_check_branch
          %603 = sbr.rel (%p601) target = $region56
        $region55: #{tpu_custom_call.1} parent=11 // pred_region
          _
        $region56: #{tpu_custom_call.1} parent=11 // pred_fallthru
          _
        // Predicated region
        $region57: #{tpu_custom_call.1} parent=11 // pred_check
          %p604 = pneg %p295
        $region58: #{tpu_custom_call.1} parent=11 // pred_check_branch
          %606 = sbr.rel (%p604) target = $region60
        $region59: #{tpu_custom_call.1} parent=11 // pred_region
          _
        $region60: #{tpu_custom_call.1} parent=11 // pred_fallthru
          _
        // Predicated region
        $region61: #{tpu_custom_call.1} parent=11 // pred_check
          %p607 = pneg %p316
        $region62: #{tpu_custom_call.1} parent=11 // pred_check_branch
          %609 = sbr.rel (%p607) target = $region64
        $region63: #{tpu_custom_call.1} parent=11 // pred_region
          _
        $region64: #{tpu_custom_call.1} parent=11 // pred_fallthru
          _
        // Predicated region
        $region65: #{tpu_custom_call.1} parent=11 // pred_check
          %p610 = pneg %p337
        $region66: #{tpu_custom_call.1} parent=11 // pred_check_branch
          %612 = sbr.rel (%p610) target = $region68
        $region67: #{tpu_custom_call.1} parent=11 // pred_region
          _
        $region68: #{tpu_custom_call.1} parent=11 // pred_fallthru
          _
        // Predicated region
        $region69: #{tpu_custom_call.1} parent=11 // pred_check
          %p613 = pneg %p358
        $region70: #{tpu_custom_call.1} parent=11 // pred_check_branch
          %615 = sbr.rel (%p613) target = $region72
        $region71: #{tpu_custom_call.1} parent=11 // pred_region
          _
        $region72: #{tpu_custom_call.1} parent=11 // pred_fallthru
          _
        // Predicated region
        $region73: #{tpu_custom_call.1} parent=11 // pred_check
          %p616 = pneg %p379
        $region74: #{tpu_custom_call.1} parent=11 // pred_check_branch
          %618 = sbr.rel (%p616) target = $region76
        $region75: #{tpu_custom_call.1} parent=11 // pred_region
          _
        $region76: #{tpu_custom_call.1} parent=11 // pred_fallthru
          _
        // Predicated region
        $region77: #{tpu_custom_call.1} parent=11 // pred_check
          %p619 = pneg %p400
        $region78: #{tpu_custom_call.1} parent=11 // pred_check_branch
          %621 = sbr.rel (%p619) target = $region80
        $region79: #{tpu_custom_call.1} parent=11 // pred_region
          _
        $region80: #{tpu_custom_call.1} parent=11 // pred_fallthru
          _
        // Predicated region
        $region81: #{tpu_custom_call.1} parent=11 // pred_check
          %p622 = pneg %p421
        $region82: #{tpu_custom_call.1} parent=11 // pred_check_branch
          %624 = sbr.rel (%p622) target = $region84
        $region83: #{tpu_custom_call.1} parent=11 // pred_region
          _
        $region84: #{tpu_custom_call.1} parent=11 // pred_fallthru
          _
        // Predicated region
        $region85: #{tpu_custom_call.1} parent=11 // pred_check
          %p625 = pneg %p442
        $region86: #{tpu_custom_call.1} parent=11 // pred_check_branch
          %627 = sbr.rel (%p625) target = $region88
        $region87: #{tpu_custom_call.1} parent=11 // pred_region
          _
        $region88: #{tpu_custom_call.1} parent=11 // pred_fallthru
          _
        // Predicated region
        $region89: #{tpu_custom_call.1} parent=11 // pred_check
          %p628 = pneg %p463
        $region90: #{tpu_custom_call.1} parent=11 // pred_check_branch
          %630 = sbr.rel (%p628) target = $region92
        $region91: #{tpu_custom_call.1} parent=11 // pred_region
          %632 = vsyncadd [#allocation9], 0
          %s633 = sshll.u32 %s20, 4
          %s634 = int_to_ptr.hbm [resolvable:$true] %s633
          %s635 = sshll.u32 [#allocation8], 4
          %s636 = int_to_ptr.vmem [resolvable:$true] %s635
          %641 = dma.hbm_to_vmem [thread:$0]  %s634, 512, %s636, [#allocation9], 64, 64, 4
        $region92: #{tpu_custom_call.1} parent=11 // pred_fallthru
          _
        // Predicated region
        $region93: #{tpu_custom_call.1} parent=11 // pred_check
          %p642 = pneg %p484
        $region94: #{tpu_custom_call.1} parent=11 // pred_check_branch
          %644 = sbr.rel (%p642) target = $region96
        $region95: #{tpu_custom_call.1} parent=11 // pred_region
          _
        $region96: #{tpu_custom_call.1} parent=11 // pred_fallthru
          _
      $region12: #{tpu_custom_call.1} parent=5 // pred_fallthru
        _
      %p645 = scmp.lt.s32.totalorder %s43, 8
      // Predicated region
      $region97: #{tpu_custom_call.1} parent=5 // pred_check
        %p646 = pneg %p645
      $region98: #{tpu_custom_call.1} parent=5 // pred_check_branch
        %648 = sbr.rel (%p646) target = $region100
      $region99: #{tpu_custom_call.1} parent=5 // pred_region
        _
      $region100: #{tpu_custom_call.1} parent=5 // pred_fallthru
        _
      %p649 = scmp.le.s32.totalorder 1, %s43
      %p650 = scmp.lt.s32.totalorder %s43, 9
      %p651 = pnand %p649, %p650
      %p652 = pneg %p651
      // Predicated region
      $region101: #{tpu_custom_call.1} parent=5 // pred_check
        _
      $region102: #{tpu_custom_call.1} parent=5 // pred_check_branch
        %654 = sbr.rel (%p651) target = $region104
      $region103: #{tpu_custom_call.1} parent=5 // pred_region
        %s655 = ssub.s32 %s43, 1
        // Predicated region
        $region105: #{tpu_custom_call.1} parent=103 // pred_check
          %p656 = pneg %p85
        $region106: #{tpu_custom_call.1} parent=103 // pred_check_branch
          %658 = sbr.rel (%p656) target = $region108
        $region107: #{tpu_custom_call.1} parent=103 // pred_region
          %660 = dma.done [#allocation6], 16
        $region108: #{tpu_custom_call.1} parent=103 // pred_fallthru
          _
        // Predicated region
        $region109: #{tpu_custom_call.1} parent=103 // pred_check
          %p661 = pneg %p463
        $region110: #{tpu_custom_call.1} parent=103 // pred_check_branch
          %663 = sbr.rel (%p661) target = $region112
        $region111: #{tpu_custom_call.1} parent=103 // pred_region
          %665 = dma.done [#allocation9], 512
        $region112: #{tpu_custom_call.1} parent=103 // pred_fallthru
          _
        %p666 = pneg %p64
        %p667 = pneg %p61
        %p668 = pneg %p85
        %p669 = pneg %p82
        %p670 = pneg %p106
        %p671 = pneg %p103
        %p672 = pneg %p127
        %p673 = pneg %p124
        %p674 = pneg %p148
        %p675 = pneg %p145
        %p676 = pneg %p169
        %p677 = pneg %p166
        %p678 = pneg %p190
        %p679 = pneg %p187
        %p680 = pneg %p211
        %p681 = pneg %p208
        %p682 = pneg %p232
        %p683 = pneg %p229
        %p684 = pneg %p253
        %p685 = pneg %p250
        %p686 = pneg %p274
        %p687 = pneg %p271
        %p688 = pneg %p295
        %p689 = pneg %p292
        %p690 = pneg %p316
        %p691 = pneg %p313
        %p692 = pneg %p337
        %p693 = pneg %p334
        %p694 = pneg %p358
        %p695 = pneg %p355
        %p696 = pneg %p379
        %p697 = pneg %p376
        %p698 = pneg %p400
        %p699 = pneg %p397
        %p700 = pneg %p421
        %p701 = pneg %p418
        %p702 = pneg %p442
        %p703 = pneg %p439
        %p704 = pneg %p463
        %p705 = pneg %p460
        %p706 = pneg %p484
        %p707 = pneg %p481
        %p708 = pneg %p505
        %p709 = pneg %p502
        %p710 = pneg %p526
        %p711 = pneg %p523
        %p712 = pneg %p547
        %p713 = pneg %p544
        %p714 = scmp.eq.s32.totalorder %s48, 0
        // Predicated region
        $region113: #{tpu_custom_call.1} parent=103 // pred_check
          %p715 = pneg %p714
        $region114: #{tpu_custom_call.1} parent=103 // pred_check_branch
          %717 = sbr.rel (%p715) target = $region116
        $region115: #{tpu_custom_call.1} parent=103 // pred_region
          %v718 = vld [vmem:[#allocation5] sm:$0x1]
          %vm719 = vcmask 516096
          %720 = vst.msk [vmem:[#allocation2] sm:$0x1] %vm719, %v718
        $region116: #{tpu_custom_call.1} parent=103 // pred_fallthru
          _
        %s721 = sld [smem:[#allocation4 + %s48]]
        %s722 = scalar_lea.vmem %s1, %s721
        %v723 = vld [vmem:[%s722] sm:$0x1]
        %v724 = vld [vmem:[#allocation2] sm:$0x1]
        %v725 = vld [vmem:[%s4] sm:$0xf]
        %v726 = vld [vmem:[%s4 + $0x4] sm:$0xf]
        %v727 = vld [vmem:[%s4 + $0x8] sm:$0xf]
        %v728 = vld [vmem:[%s4 + $0xc] sm:$0xf]
        %v729 = vld [vmem:[%s4 + $0x10] sm:$0xf]
        %v730 = vld [vmem:[%s4 + $0x14] sm:$0xf]
        %v731 = vld [vmem:[%s4 + $0x18] sm:$0xf]
        %v732 = vld [vmem:[%s4 + $0x1c] sm:$0xf]
        %v733 = vunpack.c.l.bf16 %v725
        %v734 = vunpack.c.l.bf16 %v726
        %v735 = vunpack.c.l.bf16 %v727
        %v736 = vunpack.c.l.bf16 %v728
        %v737 = vunpack.c.l.bf16 %v729
        %v738 = vunpack.c.l.bf16 %v730
        %v739 = vunpack.c.l.bf16 %v731
        %v740 = vunpack.c.l.bf16 %v732
        %v741 = vld [vmem:[%s5] sm:$0xf]
        %v742 = vld [vmem:[%s5 + $0x4] sm:$0xf]
        %v743 = vld [vmem:[%s5 + $0x8] sm:$0xf]
        %v744 = vld [vmem:[%s5 + $0xc] sm:$0xf]
        %v745 = vld [vmem:[%s5 + $0x10] sm:$0xf]
        %v746 = vld [vmem:[%s5 + $0x14] sm:$0xf]
        %v747 = vld [vmem:[%s5 + $0x18] sm:$0xf]
        %v748 = vld [vmem:[%s5 + $0x1c] sm:$0xf]
        %v749 = vunpack.c.l.bf16 %v741
        %v750 = vunpack.c.l.bf16 %v742
        %v751 = vunpack.c.l.bf16 %v743
        %v752 = vunpack.c.l.bf16 %v744
        %v753 = vunpack.c.l.bf16 %v745
        %v754 = vunpack.c.l.bf16 %v746
        %v755 = vunpack.c.l.bf16 %v747
        %v756 = vunpack.c.l.bf16 %v748
        %vm757 = vcmask 523264
        %v759 = vsel %vm757, %v724, 0
        %761 = vmatpush.msra.mxu0 0.0
        %762 = vmatpush.msra.mxu0 0.0
        %763 = vmatpush.msra.mxu0 0.0
        %764 = vmatpush.msra.mxu0 0.0
        %765 = vmatpush.msra.mxu0 0.0
        %766 = vmatpush.msra.mxu0 0.0
        %767 = vmatpush.msra.mxu0 0.0
        %768 = vmatpush.msra.mxu0 0.0
        %769 = vmatpush.msra.mxu0 %v756
        %770 = vmatpush.msra.mxu0 %v755
        %771 = vmatpush.msra.mxu0 %v754
        %772 = vmatpush.msra.mxu0 %v753
        %773 = vmatpush.msra.mxu0 %v752
        %774 = vmatpush.msra.mxu0 %v751
        %775 = vmatpush.msra.mxu0 %v750
        %776 = vmatpush.msra.mxu0 %v749
        %777 = vmatmul.f32.gmra.mxu0 %v759
        %v778 = vpop.f32.mrf.mxu0
        %v779 = vadd.f32 0.0, %v778
        %780 = vdwg.mxu0
        %v782 = vsel %vm757, %v723, 0
        %784 = vmatpush.msra.mxu0 0.0
        %785 = vmatpush.msra.mxu0 0.0
        %786 = vmatpush.msra.mxu0 0.0
        %787 = vmatpush.msra.mxu0 0.0
        %788 = vmatpush.msra.mxu0 0.0
        %789 = vmatpush.msra.mxu0 0.0
        %790 = vmatpush.msra.mxu0 0.0
        %791 = vmatpush.msra.mxu0 0.0
        %792 = vmatpush.msra.mxu0 %v740
        %793 = vmatpush.msra.mxu0 %v739
        %794 = vmatpush.msra.mxu0 %v738
        %795 = vmatpush.msra.mxu0 %v737
        %796 = vmatpush.msra.mxu0 %v736
        %797 = vmatpush.msra.mxu0 %v735
        %798 = vmatpush.msra.mxu0 %v734
        %799 = vmatpush.msra.mxu0 %v733
        %800 = vmatmul.f32.gmra.mxu0 %v782
        %v801 = vpop.f32.mrf.mxu0
        %v802 = vadd.f32 %v779, %v801
        %803 = vdwg.mxu0
        %v804 = vld [vmem:[%s6] sm:$0x1]
        %v805 = vadd.f32 %v802, %v804
        %vm806 = vcmask 1040384
        %v807 = vsel %vm806, %v805, -inf
        %808 = vmax.xlane.f32.xlu0 %v807
        %v809 = vpop.xlane.xlu0 %808
        %v810 = vsub.f32 %v805, %v809
        %v811 = vmul.f32 %v810, 1.442695
        %v812 = vpow.pop %v811
        %v813 = vsel %vm806, %v812, 0.0
        %814 = vadd.xlane.f32.xlu0 %v813
        %v815 = vpop.xlane.xlu0 %814
        %v816 = vrcp.pop %v815
        %v817 = vmul.f32 %v812, %v816
        %s818 = scalar_lea.vmem [#allocation13], %s48
        %819 = vst [vmem:[%s818] sm:$0x1] %v817
        %v820 = vld [vmem:[%s3] sm:$0xff]
        %v821 = vld [vmem:[%s3 + $0x8] sm:$0xff]
        %v822 = vld [vmem:[%s3 + $0x10] sm:$0xff]
        %v823 = vld [vmem:[%s3 + $0x18] sm:$0xff]
        %v824 = vld [vmem:[%s3 + $0x20] sm:$0xff]
        %v825 = vld [vmem:[%s3 + $0x28] sm:$0xff]
        %v826 = vld [vmem:[%s3 + $0x30] sm:$0xff]
        %v827 = vld [vmem:[%s3 + $0x38] sm:$0xff]
        %v828 = vld [vmem:[%s3 + $0x40] sm:$0xff]
        %v829 = vld [vmem:[%s3 + $0x48] sm:$0xff]
        %v830 = vld [vmem:[%s3 + $0x50] sm:$0xff]
        %v831 = vld [vmem:[%s3 + $0x58] sm:$0xff]
        %v832 = vld [vmem:[%s3 + $0x60] sm:$0xff]
        %v833 = vld [vmem:[%s3 + $0x68] sm:$0xff]
        %v834 = vld [vmem:[%s3 + $0x70] sm:$0xff]
        %v835 = vld [vmem:[%s3 + $0x78] sm:$0xff]
        %836 = vmatpush.msra.mxu0 %v835
        %837 = vmatpush.msra.mxu0 %v834
        %838 = vmatpush.msra.mxu0 %v833
        %839 = vmatpush.msra.mxu0 %v832
        %840 = vmatpush.msra.mxu0 %v831
        %841 = vmatpush.msra.mxu0 %v830
        %842 = vmatpush.msra.mxu0 %v829
        %843 = vmatpush.msra.mxu0 %v828
        %844 = vmatpush.msra.mxu0 %v827
        %845 = vmatpush.msra.mxu0 %v826
        %846 = vmatpush.msra.mxu0 %v825
        %847 = vmatpush.msra.mxu0 %v824
        %848 = vmatpush.msra.mxu0 %v823
        %849 = vmatpush.msra.mxu0 %v822
        %850 = vmatpush.msra.mxu0 %v821
        %851 = vmatpush.msra.mxu0 %v820
        %852 = vmatmul.f32.gmra.mxu0 %v817
        %v853 = vpop.f32.mrf.mxu0
        %v854 = vadd.f32 0.0, %v853
        %855 = vdwg.mxu0
        %v856 = vld [vmem:[%s7] sm:$0xf]
        %v857 = vld [vmem:[%s7 + $0x4] sm:$0xf]
        %v858 = vld [vmem:[%s7 + $0x8] sm:$0xf]
        %v859 = vld [vmem:[%s7 + $0xc] sm:$0xf]
        %v860 = vld [vmem:[%s7 + $0x10] sm:$0xf]
        %v861 = vld [vmem:[%s7 + $0x14] sm:$0xf]
        %v862 = vld [vmem:[%s7 + $0x18] sm:$0xf]
        %v863 = vld [vmem:[%s7 + $0x1c] sm:$0xf]
        %v864 = vunpack.c.l.bf16 %v856
        %v865 = vunpack.c.l.bf16 %v857
        %v866 = vunpack.c.l.bf16 %v858
        %v867 = vunpack.c.l.bf16 %v859
        %v868 = vunpack.c.l.bf16 %v860
        %v869 = vunpack.c.l.bf16 %v861
        %v870 = vunpack.c.l.bf16 %v862
        %v871 = vunpack.c.l.bf16 %v863
        %v872 = vld [vmem:[%s8] sm:$0xf]
        %v873 = vld [vmem:[%s8 + $0x4] sm:$0xf]
        %v874 = vld [vmem:[%s8 + $0x8] sm:$0xf]
        %v875 = vld [vmem:[%s8 + $0xc] sm:$0xf]
        %v876 = vld [vmem:[%s8 + $0x10] sm:$0xf]
        %v877 = vld [vmem:[%s8 + $0x14] sm:$0xf]
        %v878 = vld [vmem:[%s8 + $0x18] sm:$0xf]
        %v879 = vld [vmem:[%s8 + $0x1c] sm:$0xf]
        %v880 = vunpack.c.l.bf16 %v872
        %v881 = vunpack.c.l.bf16 %v873
        %v882 = vunpack.c.l.bf16 %v874
        %v883 = vunpack.c.l.bf16 %v875
        %v884 = vunpack.c.l.bf16 %v876
        %v885 = vunpack.c.l.bf16 %v877
        %v886 = vunpack.c.l.bf16 %v878
        %v887 = vunpack.c.l.bf16 %v879
        %v889 = vsel %vm757, %v854, 0
        %891 = vmatpush.msra.mxu0 0.0
        %892 = vmatpush.msra.mxu0 0.0
        %893 = vmatpush.msra.mxu0 0.0
        %894 = vmatpush.msra.mxu0 0.0
        %895 = vmatpush.msra.mxu0 0.0
        %896 = vmatpush.msra.mxu0 0.0
        %897 = vmatpush.msra.mxu0 0.0
        %898 = vmatpush.msra.mxu0 0.0
        %899 = vmatpush.msra.mxu0 %v887
        %900 = vmatpush.msra.mxu0 %v886
        %901 = vmatpush.msra.mxu0 %v885
        %902 = vmatpush.msra.mxu0 %v884
        %903 = vmatpush.msra.mxu0 %v883
        %904 = vmatpush.msra.mxu0 %v882
        %905 = vmatpush.msra.mxu0 %v881
        %906 = vmatpush.msra.mxu0 %v880
        %907 = vmatmul.f32.gmra.mxu0 %v889
        %v908 = vpop.f32.mrf.mxu0
        %v909 = vadd.f32 0.0, %v908
        %910 = vdwg.mxu0
        %911 = vmatpush.msra.mxu0 0.0
        %912 = vmatpush.msra.mxu0 0.0
        %913 = vmatpush.msra.mxu0 0.0
        %914 = vmatpush.msra.mxu0 0.0
        %915 = vmatpush.msra.mxu0 0.0
        %916 = vmatpush.msra.mxu0 0.0
        %917 = vmatpush.msra.mxu0 0.0
        %918 = vmatpush.msra.mxu0 0.0
        %919 = vmatpush.msra.mxu0 %v871
        %920 = vmatpush.msra.mxu0 %v870
        %921 = vmatpush.msra.mxu0 %v869
        %922 = vmatpush.msra.mxu0 %v868
        %923 = vmatpush.msra.mxu0 %v867
        %924 = vmatpush.msra.mxu0 %v866
        %925 = vmatpush.msra.mxu0 %v865
        %926 = vmatpush.msra.mxu0 %v864
        %927 = vmatmul.f32.gmra.mxu0 %v782
        %v928 = vpop.f32.mrf.mxu0
        %v929 = vadd.f32 %v909, %v928
        %930 = vdwg.mxu0
        %v931 = vld [vmem:[%s9] sm:$0x1]
        %v932 = vadd.f32 %v929, %v931
        %v933 = vmax.f32 %v932, 0.0
        %v934 = vld [vmem:[%s10] sm:$0xf]
        %v935 = vld [vmem:[%s10 + $0x4] sm:$0xf]
        %v936 = vld [vmem:[%s10 + $0x8] sm:$0xf]
        %v937 = vld [vmem:[%s10 + $0xc] sm:$0xf]
        %v938 = vld [vmem:[%s10 + $0x10] sm:$0xf]
        %v939 = vld [vmem:[%s10 + $0x14] sm:$0xf]
        %v940 = vld [vmem:[%s10 + $0x18] sm:$0xf]
        %v941 = vld [vmem:[%s10 + $0x1c] sm:$0xf]
        %v942 = vunpack.c.l.bf16 %v934
        %v943 = vunpack.c.l.bf16 %v935
        %v944 = vunpack.c.l.bf16 %v936
        %v945 = vunpack.c.l.bf16 %v937
        %v946 = vunpack.c.l.bf16 %v938
        %v947 = vunpack.c.l.bf16 %v939
        %v948 = vunpack.c.l.bf16 %v940
        %v949 = vunpack.c.l.bf16 %v941
        %v950 = vld [vmem:[%s13] sm:$0xf]
        %v951 = vld [vmem:[%s13 + $0x4] sm:$0xf]
        %v952 = vld [vmem:[%s13 + $0x8] sm:$0xf]
        %v953 = vld [vmem:[%s13 + $0xc] sm:$0xf]
        %v954 = vld [vmem:[%s13 + $0x10] sm:$0xf]
        %v955 = vld [vmem:[%s13 + $0x14] sm:$0xf]
        %v956 = vld [vmem:[%s13 + $0x18] sm:$0xf]
        %v957 = vld [vmem:[%s13 + $0x1c] sm:$0xf]
        %v958 = vunpack.c.l.bf16 %v950
        %v959 = vunpack.c.l.bf16 %v951
        %v960 = vunpack.c.l.bf16 %v952
        %v961 = vunpack.c.l.bf16 %v953
        %v962 = vunpack.c.l.bf16 %v954
        %v963 = vunpack.c.l.bf16 %v955
        %v964 = vunpack.c.l.bf16 %v956
        %v965 = vunpack.c.l.bf16 %v957
        %966 = vmatpush.msra.mxu0 0.0
        %967 = vmatpush.msra.mxu0 0.0
        %968 = vmatpush.msra.mxu0 0.0
        %969 = vmatpush.msra.mxu0 0.0
        %970 = vmatpush.msra.mxu0 0.0
        %971 = vmatpush.msra.mxu0 0.0
        %972 = vmatpush.msra.mxu0 0.0
        %973 = vmatpush.msra.mxu0 0.0
        %974 = vmatpush.msra.mxu0 %v965
        %975 = vmatpush.msra.mxu0 %v964
        %976 = vmatpush.msra.mxu0 %v963
        %977 = vmatpush.msra.mxu0 %v962
        %978 = vmatpush.msra.mxu0 %v961
        %979 = vmatpush.msra.mxu0 %v960
        %980 = vmatpush.msra.mxu0 %v959
        %981 = vmatpush.msra.mxu0 %v958
        %982 = vmatmul.f32.gmra.mxu0 %v759
        %v983 = vpop.f32.mrf.mxu0
        %v984 = vadd.f32 0.0, %v983
        %985 = vdwg.mxu0
        %v987 = vsel %vm757, %v933, 0
        %989 = vmatpush.msra.mxu0 0.0
        %990 = vmatpush.msra.mxu0 0.0
        %991 = vmatpush.msra.mxu0 0.0
        %992 = vmatpush.msra.mxu0 0.0
        %993 = vmatpush.msra.mxu0 0.0
        %994 = vmatpush.msra.mxu0 0.0
        %995 = vmatpush.msra.mxu0 0.0
        %996 = vmatpush.msra.mxu0 0.0
        %997 = vmatpush.msra.mxu0 %v949
        %998 = vmatpush.msra.mxu0 %v948
        %999 = vmatpush.msra.mxu0 %v947
        %1000 = vmatpush.msra.mxu0 %v946
        %1001 = vmatpush.msra.mxu0 %v945
        %1002 = vmatpush.msra.mxu0 %v944
        %1003 = vmatpush.msra.mxu0 %v943
        %1004 = vmatpush.msra.mxu0 %v942
        %1005 = vmatmul.f32.gmra.mxu0 %v987
        %v1006 = vpop.f32.mrf.mxu0
        %v1007 = vadd.f32 %v984, %v1006
        %1008 = vdwg.mxu0
        %v1009 = vld [vmem:[%s16] sm:$0x1]
        %v1010 = vadd.f32 %v1007, %v1009
        %v1011 = vxor.u32 %v1010, 2147483648
        %v1012 = vmul.f32 %v1011, 1.442695
        %v1013 = vpow.pop %v1012
        %v1014 = vadd.f32 %v1013, 1.0
        %v1015 = vrcp.pop %v1014
        %v1016 = vmul.f32 %v1014, %v1015
        %v1017 = vsub.f32 1.0, %v1016
        %v1018 = vmul.f32 %v1015, %v1017
        %v1019 = vadd.f32 %v1015, %v1018
        %vm1020 = vweird.f32 %v1014
        %vm1021 = vweird.f32 %v1015
        %vm1022 = vmor %vm1020, %vm1021
        %v1023 = vsel %vm1022, %v1015, %v1019
        %v1024 = vand.u32 2147483647, %v1014
        %vm1025 = vcmp.eq.f32.partialorder %v1024, 8.507059e+37
        %v1026 = vand.u32 %v1014, 2147483648
        %v1027 = vor.u32 1.1754944e-38, %v1026
        %v1028 = vsel %vm1025, %v1027, %v1023
        %v1029 = vmul.f32 1.0, %v1028
        %v1030 = vld [vmem:[%s11] sm:$0xf]
        %v1031 = vld [vmem:[%s11 + $0x4] sm:$0xf]
        %v1032 = vld [vmem:[%s11 + $0x8] sm:$0xf]
        %v1033 = vld [vmem:[%s11 + $0xc] sm:$0xf]
        %v1034 = vld [vmem:[%s11 + $0x10] sm:$0xf]
        %v1035 = vld [vmem:[%s11 + $0x14] sm:$0xf]
        %v1036 = vld [vmem:[%s11 + $0x18] sm:$0xf]
        %v1037 = vld [vmem:[%s11 + $0x1c] sm:$0xf]
        %v1038 = vunpack.c.l.bf16 %v1030
        %v1039 = vunpack.c.l.bf16 %v1031
        %v1040 = vunpack.c.l.bf16 %v1032
        %v1041 = vunpack.c.l.bf16 %v1033
        %v1042 = vunpack.c.l.bf16 %v1034
        %v1043 = vunpack.c.l.bf16 %v1035
        %v1044 = vunpack.c.l.bf16 %v1036
        %v1045 = vunpack.c.l.bf16 %v1037
        %v1046 = vld [vmem:[%s14] sm:$0xf]
        %v1047 = vld [vmem:[%s14 + $0x4] sm:$0xf]
        %v1048 = vld [vmem:[%s14 + $0x8] sm:$0xf]
        %v1049 = vld [vmem:[%s14 + $0xc] sm:$0xf]
        %v1050 = vld [vmem:[%s14 + $0x10] sm:$0xf]
        %v1051 = vld [vmem:[%s14 + $0x14] sm:$0xf]
        %v1052 = vld [vmem:[%s14 + $0x18] sm:$0xf]
        %v1053 = vld [vmem:[%s14 + $0x1c] sm:$0xf]
        %v1054 = vunpack.c.l.bf16 %v1046
        %v1055 = vunpack.c.l.bf16 %v1047
        %v1056 = vunpack.c.l.bf16 %v1048
        %v1057 = vunpack.c.l.bf16 %v1049
        %v1058 = vunpack.c.l.bf16 %v1050
        %v1059 = vunpack.c.l.bf16 %v1051
        %v1060 = vunpack.c.l.bf16 %v1052
        %v1061 = vunpack.c.l.bf16 %v1053
        %1062 = vmatpush.msra.mxu0 0.0
        %1063 = vmatpush.msra.mxu0 0.0
        %1064 = vmatpush.msra.mxu0 0.0
        %1065 = vmatpush.msra.mxu0 0.0
        %1066 = vmatpush.msra.mxu0 0.0
        %1067 = vmatpush.msra.mxu0 0.0
        %1068 = vmatpush.msra.mxu0 0.0
        %1069 = vmatpush.msra.mxu0 0.0
        %1070 = vmatpush.msra.mxu0 %v1061
        %1071 = vmatpush.msra.mxu0 %v1060
        %1072 = vmatpush.msra.mxu0 %v1059
        %1073 = vmatpush.msra.mxu0 %v1058
        %1074 = vmatpush.msra.mxu0 %v1057
        %1075 = vmatpush.msra.mxu0 %v1056
        %1076 = vmatpush.msra.mxu0 %v1055
        %1077 = vmatpush.msra.mxu0 %v1054
        %1078 = vmatmul.f32.gmra.mxu0 %v759
        %v1079 = vpop.f32.mrf.mxu0
        %v1080 = vadd.f32 0.0, %v1079
        %1081 = vdwg.mxu0
        %1082 = vmatpush.msra.mxu0 0.0
        %1083 = vmatpush.msra.mxu0 0.0
        %1084 = vmatpush.msra.mxu0 0.0
        %1085 = vmatpush.msra.mxu0 0.0
        %1086 = vmatpush.msra.mxu0 0.0
        %1087 = vmatpush.msra.mxu0 0.0
        %1088 = vmatpush.msra.mxu0 0.0
        %1089 = vmatpush.msra.mxu0 0.0
        %1090 = vmatpush.msra.mxu0 %v1045
        %1091 = vmatpush.msra.mxu0 %v1044
        %1092 = vmatpush.msra.mxu0 %v1043
        %1093 = vmatpush.msra.mxu0 %v1042
        %1094 = vmatpush.msra.mxu0 %v1041
        %1095 = vmatpush.msra.mxu0 %v1040
        %1096 = vmatpush.msra.mxu0 %v1039
        %1097 = vmatpush.msra.mxu0 %v1038
        %1098 = vmatmul.f32.gmra.mxu0 %v987
        %v1099 = vpop.f32.mrf.mxu0
        %v1100 = vadd.f32 %v1080, %v1099
        %1101 = vdwg.mxu0
        %v1102 = vld [vmem:[%s17] sm:$0x1]
        %v1103 = vadd.f32 %v1100, %v1102
        %v1104 = vxor.u32 %v1103, 2147483648
        %v1105 = vmul.f32 %v1104, 1.442695
        %v1106 = vpow.pop %v1105
        %v1107 = vadd.f32 %v1106, 1.0
        %v1108 = vrcp.pop %v1107
        %v1109 = vmul.f32 %v1107, %v1108
        %v1110 = vsub.f32 1.0, %v1109
        %v1111 = vmul.f32 %v1108, %v1110
        %v1112 = vadd.f32 %v1108, %v1111
        %vm1113 = vweird.f32 %v1107
        %vm1114 = vweird.f32 %v1108
        %vm1115 = vmor %vm1113, %vm1114
        %v1116 = vsel %vm1115, %v1108, %v1112
        %v1117 = vand.u32 2147483647, %v1107
        %vm1118 = vcmp.eq.f32.partialorder %v1117, 8.507059e+37
        %v1119 = vand.u32 %v1107, 2147483648
        %v1120 = vor.u32 1.1754944e-38, %v1119
        %v1121 = vsel %vm1118, %v1120, %v1116
        %v1122 = vmul.f32 1.0, %v1121
        %v1123 = vld [vmem:[%s12] sm:$0xf]
        %v1124 = vld [vmem:[%s12 + $0x4] sm:$0xf]
        %v1125 = vld [vmem:[%s12 + $0x8] sm:$0xf]
        %v1126 = vld [vmem:[%s12 + $0xc] sm:$0xf]
        %v1127 = vld [vmem:[%s12 + $0x10] sm:$0xf]
        %v1128 = vld [vmem:[%s12 + $0x14] sm:$0xf]
        %v1129 = vld [vmem:[%s12 + $0x18] sm:$0xf]
        %v1130 = vld [vmem:[%s12 + $0x1c] sm:$0xf]
        %v1131 = vunpack.c.l.bf16 %v1123
        %v1132 = vunpack.c.l.bf16 %v1124
        %v1133 = vunpack.c.l.bf16 %v1125
        %v1134 = vunpack.c.l.bf16 %v1126
        %v1135 = vunpack.c.l.bf16 %v1127
        %v1136 = vunpack.c.l.bf16 %v1128
        %v1137 = vunpack.c.l.bf16 %v1129
        %v1138 = vunpack.c.l.bf16 %v1130
        %v1139 = vld [vmem:[%s18] sm:$0x1]
        %1140 = vmatpush.msra.mxu0 0.0
        %1141 = vmatpush.msra.mxu0 0.0
        %1142 = vmatpush.msra.mxu0 0.0
        %1143 = vmatpush.msra.mxu0 0.0
        %1144 = vmatpush.msra.mxu0 0.0
        %1145 = vmatpush.msra.mxu0 0.0
        %1146 = vmatpush.msra.mxu0 0.0
        %1147 = vmatpush.msra.mxu0 0.0
        %1148 = vmatpush.msra.mxu0 %v1138
        %1149 = vmatpush.msra.mxu0 %v1137
        %1150 = vmatpush.msra.mxu0 %v1136
        %1151 = vmatpush.msra.mxu0 %v1135
        %1152 = vmatpush.msra.mxu0 %v1134
        %1153 = vmatpush.msra.mxu0 %v1133
        %1154 = vmatpush.msra.mxu0 %v1132
        %1155 = vmatpush.msra.mxu0 %v1131
        %1156 = vmatmul.f32.gmra.mxu0 %v987
        %v1157 = vpop.f32.mrf.mxu0
        %v1158 = vadd.f32 %v1139, %v1157
        %1159 = vdwg.mxu0
        %v1160 = vld [vmem:[%s15] sm:$0xf]
        %v1161 = vld [vmem:[%s15 + $0x4] sm:$0xf]
        %v1162 = vld [vmem:[%s15 + $0x8] sm:$0xf]
        %v1163 = vld [vmem:[%s15 + $0xc] sm:$0xf]
        %v1164 = vld [vmem:[%s15 + $0x10] sm:$0xf]
        %v1165 = vld [vmem:[%s15 + $0x14] sm:$0xf]
        %v1166 = vld [vmem:[%s15 + $0x18] sm:$0xf]
        %v1167 = vld [vmem:[%s15 + $0x1c] sm:$0xf]
        %v1168 = vunpack.c.l.bf16 %v1160
        %v1169 = vunpack.c.l.bf16 %v1161
        %v1170 = vunpack.c.l.bf16 %v1162
        %v1171 = vunpack.c.l.bf16 %v1163
        %v1172 = vunpack.c.l.bf16 %v1164
        %v1173 = vunpack.c.l.bf16 %v1165
        %v1174 = vunpack.c.l.bf16 %v1166
        %v1175 = vunpack.c.l.bf16 %v1167
        %v1176 = vld [vmem:[%s19] sm:$0x1]
        %1177 = vmatpush.msra.mxu0 0.0
        %1178 = vmatpush.msra.mxu0 0.0
        %1179 = vmatpush.msra.mxu0 0.0
        %1180 = vmatpush.msra.mxu0 0.0
        %1181 = vmatpush.msra.mxu0 0.0
        %1182 = vmatpush.msra.mxu0 0.0
        %1183 = vmatpush.msra.mxu0 0.0
        %1184 = vmatpush.msra.mxu0 0.0
        %1185 = vmatpush.msra.mxu0 %v1175
        %1186 = vmatpush.msra.mxu0 %v1174
        %1187 = vmatpush.msra.mxu0 %v1173
        %1188 = vmatpush.msra.mxu0 %v1172
        %1189 = vmatpush.msra.mxu0 %v1171
        %1190 = vmatpush.msra.mxu0 %v1170
        %1191 = vmatpush.msra.mxu0 %v1169
        %1192 = vmatpush.msra.mxu0 %v1168
        %1193 = vmatmul.f32.gmra.mxu0 %v759
        %v1194 = vpop.f32.mrf.mxu0
        %v1195 = vadd.f32 %v1176, %v1194
        %1196 = vdwg.mxu0
        %v1197 = vmul.f32 %v1029, %v1195
        %v1198 = vadd.f32 %v1158, %v1197
        %v1199 = vtanh.pop %v1198
        %v1200 = vsub.f32 1.0, %v1122
        %v1201 = vmul.f32 %v1200, %v1199
        %v1202 = vmul.f32 %v1122, %v724
        %v1203 = vadd.f32 %v1201, %v1202
        %vm1204 = vcmask 516096
        %1205 = vst.msk [vmem:[#allocation2] sm:$0x1] %vm1204, %v1203
        %s1206 = scalar_lea.vmem [#allocation11], %s48
        %1207 = vst.msk [vmem:[%s1206] sm:$0x1] %vm1204, %v1203
        %v1208 = vld [vmem:[#allocation8] sm:$0xf]
        %v1209 = vld [vmem:[#allocation8 + $0x4] sm:$0xf]
        %v1210 = vld [vmem:[#allocation8 + $0x8] sm:$0xf]
        %v1211 = vld [vmem:[#allocation8 + $0xc] sm:$0xf]
        %v1212 = vld [vmem:[#allocation8 + $0x10] sm:$0xf]
        %v1213 = vld [vmem:[#allocation8 + $0x14] sm:$0xf]
        %v1214 = vld [vmem:[#allocation8 + $0x18] sm:$0xf]
        %v1215 = vld [vmem:[#allocation8 + $0x1c] sm:$0xf]
        %v1216 = vunpack.c.l.bf16 %v1208
        %v1217 = vunpack.c.l.bf16 %v1209
        %v1218 = vunpack.c.l.bf16 %v1210
        %v1219 = vunpack.c.l.bf16 %v1211
        %v1220 = vunpack.c.l.bf16 %v1212
        %v1221 = vunpack.c.l.bf16 %v1213
        %v1222 = vunpack.c.l.bf16 %v1214
        %v1223 = vunpack.c.l.bf16 %v1215
        %v1224 = vld [vmem:[%s21] sm:$0x1]
        %v1226 = vsel %vm757, %v1203, 0
        %1228 = vmatpush.msra.mxu0 0.0
        %1229 = vmatpush.msra.mxu0 0.0
        %1230 = vmatpush.msra.mxu0 0.0
        %1231 = vmatpush.msra.mxu0 0.0
        %1232 = vmatpush.msra.mxu0 0.0
        %1233 = vmatpush.msra.mxu0 0.0
        %1234 = vmatpush.msra.mxu0 0.0
        %1235 = vmatpush.msra.mxu0 0.0
        %1236 = vmatpush.msra.mxu0 %v1223
        %1237 = vmatpush.msra.mxu0 %v1222
        %1238 = vmatpush.msra.mxu0 %v1221
        %1239 = vmatpush.msra.mxu0 %v1220
        %1240 = vmatpush.msra.mxu0 %v1219
        %1241 = vmatpush.msra.mxu0 %v1218
        %1242 = vmatpush.msra.mxu0 %v1217
        %1243 = vmatpush.msra.mxu0 %v1216
        %1244 = vmatmul.f32.gmra.mxu0 %v1226
        %v1245 = vpop.f32.mrf.mxu0
        %v1246 = vadd.f32 %v1224, %v1245
        %1247 = vdwg.mxu0
        %v1248 = vsel %vm806, %v1246, -inf
        %1249 = vmax.xlane.f32.xlu0 %v1248
        %v1250 = vpop.xlane.xlu0 %1249
        %v1251 = vsub.f32 %v1246, %v1250
        %v1252 = vmul.f32 %v1251, 1.442695
        %v1253 = vpow.pop %v1252
        %v1254 = vsel %vm806, %v1253, 0.0
        %1255 = vadd.xlane.f32.xlu0 %v1254
        %v1256 = vpop.xlane.xlu0 %1255
        %v1257 = vlog2.pop %v1256
        %v1258 = vmul.f32 %v1257, 0.6931472
        %v1259 = vsub.f32 %v1251, %v1258
        %s1260 = scalar_lea.vmem [#allocation10], %s48
        %1261 = vst [vmem:[%s1260] sm:$0x1] %v1259
        // Predicated region
        $region117: #{tpu_custom_call.1} parent=103 // pred_check
          %p1262 = pneg %p502
        $region118: #{tpu_custom_call.1} parent=103 // pred_check_branch
          %1264 = sbr.rel (%p1262) target = $region120
        $region119: #{tpu_custom_call.1} parent=103 // pred_region
          %1266 = vsyncadd [#allocation7], 0
          %s1268 = sshll.u32 [#allocation10], 4
          %s1269 = int_to_ptr.vmem [resolvable:$true] %s1268
          %s1270 = sshll.u32 %s22, 4
          %s1271 = int_to_ptr.hbm [resolvable:$true] %s1270
          %1273 = dma.vmem_to_hbm [thread:$0]  %s1269, 128, %s1271, [#allocation7]
        $region120: #{tpu_custom_call.1} parent=103 // pred_fallthru
          _
        // Predicated region
        $region121: #{tpu_custom_call.1} parent=103 // pred_check
          %p1274 = pneg %p523
        $region122: #{tpu_custom_call.1} parent=103 // pred_check_branch
          %1276 = sbr.rel (%p1274) target = $region124
        $region123: #{tpu_custom_call.1} parent=103 // pred_region
          %1278 = vsyncadd [#allocation12], 0
          %s1280 = sshll.u32 [#allocation11], 4
          %s1281 = int_to_ptr.vmem [resolvable:$true] %s1280
          %s1282 = sshll.u32 %s23, 4
          %s1283 = int_to_ptr.hbm [resolvable:$true] %s1282
          %1285 = dma.vmem_to_hbm [thread:$0]  %s1281, 128, %s1283, [#allocation12]
        $region124: #{tpu_custom_call.1} parent=103 // pred_fallthru
          _
        // Predicated region
        $region125: #{tpu_custom_call.1} parent=103 // pred_check
          %p1286 = pneg %p544
        $region126: #{tpu_custom_call.1} parent=103 // pred_check_branch
          %1288 = sbr.rel (%p1286) target = $region128
        $region127: #{tpu_custom_call.1} parent=103 // pred_region
          %1290 = vsyncadd [#allocation12], 0
          %s1292 = sshll.u32 [#allocation13], 4
          %s1293 = int_to_ptr.vmem [resolvable:$true] %s1292
          %s1294 = sshll.u32 %s24, 4
          %s1295 = int_to_ptr.hbm [resolvable:$true] %s1294
          %1297 = dma.vmem_to_hbm [thread:$0]  %s1293, 128, %s1295, [#allocation12]
        $region128: #{tpu_custom_call.1} parent=103 // pred_fallthru
          _
        // Predicated region
        $region129: #{tpu_custom_call.1} parent=103 // pred_check
          %p1298 = pneg %p502
        $region130: #{tpu_custom_call.1} parent=103 // pred_check_branch
          %1300 = sbr.rel (%p1298) target = $region132
        $region131: #{tpu_custom_call.1} parent=103 // pred_region
          %1302 = dma.done [#allocation7], 128
        $region132: #{tpu_custom_call.1} parent=103 // pred_fallthru
          _
        // Predicated region
        $region133: #{tpu_custom_call.1} parent=103 // pred_check
          %p1303 = pneg %p523
        $region134: #{tpu_custom_call.1} parent=103 // pred_check_branch
          %1305 = sbr.rel (%p1303) target = $region136
        $region135: #{tpu_custom_call.1} parent=103 // pred_region
          %1307 = dma.done [#allocation12], 128
        $region136: #{tpu_custom_call.1} parent=103 // pred_fallthru
          _
        // Predicated region
        $region137: #{tpu_custom_call.1} parent=103 // pred_check
          %p1308 = pneg %p544
        $region138: #{tpu_custom_call.1} parent=103 // pred_check_branch
          %1310 = sbr.rel (%p1308) target = $region140
        $region139: #{tpu_custom_call.1} parent=103 // pred_region
          %1312 = dma.done [#allocation12], 128
        $region140: #{tpu_custom_call.1} parent=103 // pred_fallthru
          _
      $region104: #{tpu_custom_call.1} parent=5 // pred_fallthru
        _
      %p1313 = scmp.le.s32.totalorder 2, %s43
      // Predicated region
      $region141: #{tpu_custom_call.1} parent=5 // pred_check
        %p1314 = pneg %p1313
      $region142: #{tpu_custom_call.1} parent=5 // pred_check_branch
        %1316 = sbr.rel (%p1314) target = $region144
      $region143: #{tpu_custom_call.1} parent=5 // pred_region
        %s1317 = ssub.s32 %s43, 2
      $region144: #{tpu_custom_call.1} parent=5 // pred_fallthru
        _
    $region6: #{tpu_custom_call.1} parent=1 // loop_footer
      %s47 = sadd.s32 1, %s43
    $region7: #{tpu_custom_call.1} parent=1 // loop_footer_branch
      %42 = sbr.rel target = $region3
    $region8: #{tpu_custom_call.1} parent=1 // loop_exit
      _
    %1318 = vsyncpa [#allocation6], 1
    %s1319 = scalar_lea.sflag [#allocation6], 1
    %1320 = vsyncpa %s1319, 1
    %1321 = vsyncpa [#allocation9], 1
    %1322 = vsyncpa [#allocation7], 1
    %s1323 = scalar_lea.sflag [#allocation7], 1
    %1324 = vsyncpa %s1323, 1
    %1325 = vsyncpa [#allocation12], 1

</llo_original>
